<compile_context>
chip_gen: v7x
topology: tpu7x:2x2x1
jax: 0.10.0
libtpu: 0.0.40
codegen_flags: <defaults>
</compile_context>

<pallas_src>
import functools

import jax
import jax.numpy as jnp
from jax.experimental import pallas as pl
from jax.experimental.pallas import tpu as pltpu


# ----------------------------------------------------------------------------
# Kernel
# ----------------------------------------------------------------------------
def _head_kernel(x_ref, w_ref, b_ref, out_ref, fc_ref, acc_ref, *, inv_hw):
    # x_ref  : (TB, THW, C)  feature-map tile, channels last
    # w_ref  : (C, N)        fc2 weight (transposed from PyTorch (N, C)), resident
    # b_ref  : (1, N)        fc2 bias, resident
    # out_ref: (TB, N)       logits (written only on last reduction step)
    # fc_ref : (TB, C)       pooled features (written only on last reduction step)
    # acc_ref: (TB, C) f32   spatial-sum accumulator (VMEM scratch)
    s = pl.program_id(1)

    @pl.when(s == 0)
    def _init():
        acc_ref[...] = jnp.zeros_like(acc_ref)

    # Partial spatial sum with f32 accumulation; no full-tile f32 temporary.
    acc_ref[...] += jnp.sum(x_ref[...], axis=1, dtype=jnp.float32)

    @pl.when(s == pl.num_programs(1) - 1)
    def _finalize():
        fc = acc_ref[...] * inv_hw                       # (TB, C) global mean, f32
        fc_ref[...] = fc.astype(fc_ref.dtype)
        # Tiny MXU matmul, once per batch tile; keep the weight in its own dtype
        # (MXU upconverts) instead of a VPU cast of the whole weight tile.
        lhs = fc if w_ref.dtype == jnp.float32 else fc.astype(w_ref.dtype)
        logits = jnp.dot(lhs, w_ref[...], preferred_element_type=jnp.float32)
        out_ref[...] = (logits + b_ref[...]).astype(out_ref.dtype)


# ----------------------------------------------------------------------------
# Tiling / VMEM sizing helpers
# ----------------------------------------------------------------------------
def _pick_divisor(dim, max_tile, granule):
    """Largest tile <= max_tile that divides `dim` and is a multiple of
    `granule`; falls back to the full extent (always layout-legal)."""
    if dim <= max_tile:
        return dim
    t = (min(max_tile, dim) // granule) * granule
    while t >= granule:
        if dim % t == 0:
            return t
        t -= granule
    return dim


def _vmem_budget_bytes():
    """Usable VMEM budget per generation (leave headroom for Mosaic scratch)."""
    try:
        phys = int(pltpu.get_tpu_info().vmem_capacity_bytes)
    except Exception:
        phys = 128 * 2**20
    if phys <= 64 * 2**20:          # v7x: 64 MiB physical per TensorCore
        return 48 * 2**20
    return 100 * 2**20              # v5e / v6e: 128 MiB physical


# ----------------------------------------------------------------------------
# Wrapper
# ----------------------------------------------------------------------------
def joint_classifier_head(feat_cl, w_fc, b_fc, *, tb=None, thw=None):
    """feat_cl: backbone feature map, CHANNELS-LAST: (B, H, W, C) or (B, HW, C).
       w_fc: (class_num, C) PyTorch Linear weight.  b_fc: (class_num,).
       Returns (out, fc) matching JointClassifier.forward semantics (B > 1)."""
    if feat_cl.ndim == 4:
        B, H, W, C = feat_cl.shape
        HW = H * W
        x = feat_cl.reshape(B, HW, C)        # pure reshape, no HBM relayout
    else:
        B, HW, C = feat_cl.shape
        x = feat_cl
    N = w_fc.shape[0]
    assert w_fc.shape == (N, C) and b_fc.shape == (N,)

    in_dt = x.dtype
    fc_dt = x.dtype                                  # pooled features in input dtype
    out_dt = jnp.result_type(x.dtype, w_fc.dtype)    # logits
    itemsize = jnp.dtype(in_dt).itemsize
    granule = max(8, 32 // itemsize)                 # sublane pack: 8 f32 / 16 bf16 / 32 i8
    vmem_cap = _vmem_budget_bytes()

    def fixed_bytes(tb_):
        # Everything resident besides the streamed input (outputs & resident
        # inputs are double-buffered by the pipeline), plus fixed Mosaic slack.
        wb = (C * N + N) * jnp.dtype(w_fc.dtype).itemsize * 2
        fcb = tb_ * C * jnp.dtype(fc_dt).itemsize * 2
        ob = tb_ * N * jnp.dtype(out_dt).itemsize * 2
        acc = tb_ * C * 4
        return wb + fcb + ob + acc + (2 << 20)

    # ---- batch tile: multiple of 8 (or full B); keep >= 2 blocks for v7x dual-TC ----
    if tb is None:
        tb_cap = min(64, B)
        if B >= 16:
            tb_cap = min(tb_cap, B // 2)
        tb = _pick_divisor(B, tb_cap, 8)

    # ---- spatial tile: fill the double-buffer budget along the contiguous HW axis ----
    if thw is None:
        cur_tb = tb
        while True:
            budget = max(vmem_cap - fixed_bytes(cur_tb), 0)
            thw_cap = max(granule, budget // (2 * cur_tb * C * itemsize))
            thw = _pick_divisor(HW, min(int(thw_cap), HW), granule)
            if (2 * cur_tb * thw * C * itemsize + fixed_bytes(cur_tb) <= vmem_cap
                    or cur_tb <= 8):
                break
            new_tb = _pick_divisor(B, cur_tb // 2, 8)   # only when thw fell back to full HW
            if new_tb >= cur_tb:
                break
            cur_tb = new_tb
        tb = cur_tb

    assert B % tb == 0 and HW % thw == 0, "tiles must divide (B, HW)"
    assert (tb % 8 == 0) or (tb == B)          # tb is 2nd-minor dim of the output blocks
    assert (thw % 8 == 0) or (thw == HW)       # thw is 2nd-minor dim of the input block

    w_t = jnp.transpose(w_fc)                  # (C, N) — tiny, stays resident in VMEM
    b2d = b_fc.reshape(1, N)

    in_block_bytes = tb * thw * C * itemsize
    needed = 2 * in_block_bytes + fixed_bytes(tb)
    vmem_limit = int(min(vmem_cap, max(needed, 16 * 2**20)))
    vmem_limit = int(max(vmem_limit, needed))  # never below what the chosen tiles require

    cost = pl.CostEstimate(
        flops=B * HW * C + 2 * B * C * N,
        transcendentals=0,
        bytes_accessed=(B * HW * C * itemsize
                        + (C * N + N) * jnp.dtype(w_fc.dtype).itemsize
                        + B * C * jnp.dtype(fc_dt).itemsize
                        + B * N * jnp.dtype(out_dt).itemsize),
    )

    kernel = functools.partial(_head_kernel, inv_hw=1.0 / HW)

    out, fc = pl.pallas_call(
        kernel,
        out_shape=(
            jax.ShapeDtypeStruct((B, N), out_dt),   # logits
            jax.ShapeDtypeStruct((B, C), fc_dt),    # pooled features
        ),
        grid=(B // tb, HW // thw),
        in_specs=[
            pl.BlockSpec((tb, thw, C), lambda b, s: (b, s, 0)),
            pl.BlockSpec((C, N), lambda b, s: (0, 0)),
            pl.BlockSpec((1, N), lambda b, s: (0, 0)),
        ],
        out_specs=(
            pl.BlockSpec((tb, N), lambda b, s: (b, 0)),   # same block across s -> resident
            pl.BlockSpec((tb, C), lambda b, s: (b, 0)),
        ),
        scratch_shapes=[pltpu.VMEM((tb, C), jnp.float32)],
        compiler_params=pltpu.CompilerParams(
            dimension_semantics=("parallel", "arbitrary"),
            vmem_limit_bytes=vmem_limit,
        ),
        cost_estimate=cost,
    )(x, w_t, b2d)
    return out, fc


if __name__ == "__main__":
    # Small, deterministic synthetic setup. C is fixed to 2048 by fc2 = Linear(2048, class_num).
    B, H, W, C = 16, 4, 4, 2048
    CLASS_NUM = 10

    key = jax.random.PRNGKey(0)
    k_x, k_w, k_b = jax.random.split(key, 3)

    # "Backbone output" feature map, generated channels-last (no NCHW relayout).
    feat = jax.random.normal(k_x, (B, H, W, C), dtype=jnp.float32)

    # fc2 parameters, PyTorch-default-style uniform init U(-1/sqrt(C), 1/sqrt(C)).
    bound = 1.0 / (C ** 0.5)
    w_fc = jax.random.uniform(k_w, (CLASS_NUM, C), jnp.float32, -bound, bound)
    b_fc = jax.random.uniform(k_b, (CLASS_NUM,), jnp.float32, -bound, bound)

    # Pure-JAX reference.
    fc_ref = jnp.mean(feat, axis=(1, 2))                 # (B, C)
    out_ref = fc_ref @ w_fc.T + b_fc                     # (B, CLASS_NUM)

    # 1) Default budget-driven tiling (tb=8 -> 2 batch blocks, thw=full HW).
    out_a, fc_a = joint_classifier_head(feat, w_fc, b_fc)
    # 2) Explicit small tiles -> grid (2, 2): exercises the multi-step spatial reduction.
    out_b, fc_b = joint_classifier_head(feat, w_fc, b_fc, tb=8, thw=8)
    jax.block_until_ready((out_a, fc_a, out_b, fc_b))

    for out, fc in ((out_a, fc_a), (out_b, fc_b)):
        assert out.shape == (B, CLASS_NUM) and fc.shape == (B, C)
        assert jnp.allclose(fc, fc_ref, atol=1e-5, rtol=1e-5)
        assert jnp.allclose(out, out_ref, atol=1e-4, rtol=1e-4)

    print("KERNEL_OK")
</pallas_src>

<mosaic_0001>
module attributes {stable_mosaic.version = 11 : i64} {
  func.func @_head_kernel(%arg0: i32, %arg1: i32, %arg2: memref<8x16x2048xf32, #tpu.memory_space<vmem>>, %arg3: memref<2048x10xf32, #tpu.memory_space<vmem>>, %arg4: memref<1x10xf32, #tpu.memory_space<vmem>>, %arg5: memref<8x10xf32, #tpu.memory_space<vmem>>, %arg6: memref<8x2048xf32, #tpu.memory_space<vmem>>, %arg7: memref<8x2048xf32, #tpu.memory_space<vmem>>) attributes {dimension_semantics = [#tpu.dimension_semantics<parallel>, #tpu.dimension_semantics<arbitrary>], iteration_bounds = array<i64: 2, 1>, scalar_prefetch = 0 : i64, scratch_operands = 1 : i64, tpu.core_type = #tpu.core_type<tc>, window_params = [{transform_indices = @transform_0, window_bounds = array<i64: 8, 16, 2048>}, {pipeline_mode = #tpu.pipeline_mode<synchronous>, transform_indices = @transform_1, window_bounds = array<i64: 2048, 10>}, {pipeline_mode = #tpu.pipeline_mode<synchronous>, transform_indices = @transform_2, window_bounds = array<i64: 1, 10>}, {transform_indices = @transform_3, window_bounds = array<i64: 8, 10>}, {transform_indices = @transform_4, window_bounds = array<i64: 8, 2048>}]} {
    %c0_i32 = arith.constant 0 : i32
    %0 = arith.cmpi eq, %arg1, %c0_i32 : i32
    %1 = arith.extui %0 : i1 to i32
    %c0_i32_0 = arith.constant 0 : i32
    %2 = arith.cmpi ne, %1, %c0_i32_0 : i32
    scf.if %2 {
      %cst_9 = arith.constant 0.000000e+00 : f32
      %11 = vector.broadcast %cst_9 : f32 to vector<8x2048xf32>
      %c0_10 = arith.constant 0 : index
      %c0_11 = arith.constant 0 : index
      %12 = vector.load %arg7[%c0_10, %c0_11] : memref<8x2048xf32, #tpu.memory_space<vmem>>, vector<8x2048xf32>
      tpu.vector_store %arg7[%c0_10, %c0_11], %11 {strides = array<i32>} : memref<8x2048xf32, #tpu.memory_space<vmem>>, vector<8x2048xf32>,
    } else {
    }
    %c0 = arith.constant 0 : index
    %c0_1 = arith.constant 0 : index
    %3 = vector.load %arg7[%c0, %c0_1] : memref<8x2048xf32, #tpu.memory_space<vmem>>, vector<8x2048xf32>
    %c0_2 = arith.constant 0 : index
    %c0_3 = arith.constant 0 : index
    %c0_4 = arith.constant 0 : index
    %4 = vector.load %arg2[%c0_2, %c0_3, %c0_4] : memref<8x16x2048xf32, #tpu.memory_space<vmem>>, vector<8x16x2048xf32>
    %cst = arith.constant dense<0.000000e+00> : vector<8x2048xf32>
    %5 = vector.multi_reduction <add>, %4, %cst [1] : vector<8x16x2048xf32> to vector<8x2048xf32>
    %6 = arith.addf %3, %5 : vector<8x2048xf32>
    %c0_5 = arith.constant 0 : index
    %c0_6 = arith.constant 0 : index
    %7 = vector.load %arg7[%c0_5, %c0_6] : memref<8x2048xf32, #tpu.memory_space<vmem>>, vector<8x2048xf32>
    tpu.vector_store %arg7[%c0_5, %c0_6], %6 {strides = array<i32>} : memref<8x2048xf32, #tpu.memory_space<vmem>>, vector<8x2048xf32>,
    %c0_i32_7 = arith.constant 0 : i32
    %8 = arith.cmpi eq, %arg1, %c0_i32_7 : i32
    %9 = arith.extui %8 : i1 to i32
    %c0_i32_8 = arith.constant 0 : i32
    %10 = arith.cmpi ne, %9, %c0_i32_8 : i32
    scf.if %10 {
      %c0_9 = arith.constant 0 : index
      %c0_10 = arith.constant 0 : index
      %11 = vector.load %arg7[%c0_9, %c0_10] : memref<8x2048xf32, #tpu.memory_space<vmem>>, vector<8x2048xf32>
      %cst_11 = arith.constant 6.250000e-02 : f32
      %12 = vector.broadcast %cst_11 : f32 to vector<8x2048xf32>
      %13 = arith.mulf %11, %12 : vector<8x2048xf32>
      %c0_12 = arith.constant 0 : index
      %c0_13 = arith.constant 0 : index
      %14 = vector.load %arg6[%c0_12, %c0_13] : memref<8x2048xf32, #tpu.memory_space<vmem>>, vector<8x2048xf32>
      tpu.vector_store %arg6[%c0_12, %c0_13], %13 {strides = array<i32>} : memref<8x2048xf32, #tpu.memory_space<vmem>>, vector<8x2048xf32>,
      %c0_14 = arith.constant 0 : index
      %c0_15 = arith.constant 0 : index
      %15 = vector.load %arg3[%c0_14, %c0_15] : memref<2048x10xf32, #tpu.memory_space<vmem>>, vector<2048x10xf32>
      %cst_16 = arith.constant dense<0.000000e+00> : vector<8x10xf32>
      %16 = tpu.matmul %13, %15, %cst_16 {dimension_numbers = #tpu.dot_dimension_numbers<[1], [0], [0], [1], [0, 0, 1, 1], [], []>} : vector<8x2048xf32>, vector<2048x10xf32>, vector<8x10xf32> -> vector<8x10xf32>
      %c0_17 = arith.constant 0 : index
      %c0_18 = arith.constant 0 : index
      %17 = vector.load %arg4[%c0_17, %c0_18] : memref<1x10xf32, #tpu.memory_space<vmem>>, vector<1x10xf32>
      %18 = vector.broadcast %17 : vector<1x10xf32> to vector<8x10xf32>
      %19 = arith.addf %16, %18 : vector<8x10xf32>
      %c0_19 = arith.constant 0 : index
      %c0_20 = arith.constant 0 : index
      %20 = vector.load %arg5[%c0_19, %c0_20] : memref<8x10xf32, #tpu.memory_space<vmem>>, vector<8x10xf32>
      tpu.vector_store %arg5[%c0_19, %c0_20], %19 {strides = array<i32>} : memref<8x10xf32, #tpu.memory_space<vmem>>, vector<8x10xf32>,
    } else {
    }
    return
  }
  func.func @transform_0(%arg0: i32, %arg1: i32) -> (i32, i32, i32) {
    %c0_i32 = arith.constant 0 : i32
    %c0_i32_0 = arith.constant 0 : i32
    return %arg0, %arg1, %c0_i32 : i32, i32, i32
  }
  func.func @transform_1(%arg0: i32, %arg1: i32) -> (i32, i32) {
    %c0_i32 = arith.constant 0 : i32
    %c0_i32_0 = arith.constant 0 : i32
    %c0_i32_1 = arith.constant 0 : i32
    return %c0_i32, %c0_i32_0 : i32, i32
  }
  func.func @transform_2(%arg0: i32, %arg1: i32) -> (i32, i32) {
    %c0_i32 = arith.constant 0 : i32
    %c0_i32_0 = arith.constant 0 : i32
    %c0_i32_1 = arith.constant 0 : i32
    return %c0_i32, %c0_i32_0 : i32, i32
  }
  func.func @transform_3(%arg0: i32, %arg1: i32) -> (i32, i32) {
    %c0_i32 = arith.constant 0 : i32
    %c0_i32_0 = arith.constant 0 : i32
    return %arg0, %c0_i32 : i32, i32
  }
  func.func @transform_4(%arg0: i32, %arg1: i32) -> (i32, i32) {
    %c0_i32 = arith.constant 0 : i32
    %c0_i32_0 = arith.constant 0 : i32
    return %arg0, %c0_i32 : i32, i32
  }
}

</mosaic_0001>

<llo_original>
// kernel: tpu_custom_call.1
$region0: #{tpu_custom_call.1}
  #allocation0 [shape = 'u32[]', space=smem, size = 0x4, offset = 0x4, fixed_abs, tag = 'smem constant byte address 0x4 - core index']
  #allocation1 [shape = 'u32[144,128]{1,0:T(1,128)}', space=vmem, size = 0x12000, scoped, tag = 'internal scratch']
  #allocation2 [shape = 'f32[8,2048]{1,0:T(8,128)}', space=vmem, size = 0x10000, scoped, tag = 'scratch operand']
  %s0 = inlined_call_operand.hbm [shape: f32[16,16,2048], index: 0, kind: input, shape index: {}]
  %s1 = inlined_call_operand.vmem [shape: f32[2048,10], index: 1, kind: input, shape index: {}]
  %s2 = inlined_call_operand.hbm [shape: f32[1,10], index: 2, kind: input, shape index: {}]
  %s3 = inlined_call_operand.hbm [shape: f32[16,10], index: 3, kind: output, shape index: {0}]
  %s4 = inlined_call_operand.hbm [shape: f32[16,2048], index: 4, kind: output, shape index: {1}]
  %5 = xla_tuple %s3, %s4
  %s6 = sld [smem:[#allocation0]]
  $region69: #{tpu_custom_call.1} parent=0
    _
  %s8 = ssub.s32 1, %s6
  %s9 = scalar_select 0, %s8, %s6
  $region1: #{tpu_custom_call.1} parent=0
    #allocation3 [shape = 'u8[2097152]{0}', space=vmem, size = 0x200000, scoped, tag = 'input window, operand 0']
    #allocation4 [shape = 's32[2]{0}', space=sflag, size = 0x8, scoped, tag = 'scoped memory for tpu_custom_call.1']
    #allocation5 [shape = 's32[2]{0}', space=sflag, size = 0x8, scoped, tag = 'scoped memory for tpu_custom_call.1']
    #allocation6 [shape = 'u8[512]{0}', space=vmem, size = 0x400, scoped, tag = 'input window, operand 2, single buffered']
    #allocation7 [shape = 's32[1]{0}', space=sflag, size = 0x4, scoped, tag = 'scoped memory for tpu_custom_call.1']
    #allocation8 [shape = 'u8[8192]{0}', space=vmem, size = 0x2000, scoped, tag = 'output window, operand 0']
    #allocation9 [shape = 'u8[131072]{0}', space=vmem, size = 0x20000, scoped, tag = 'output window, operand 1']
    #allocation10 [shape = 's32[2]{0}', space=sflag, size = 0x8, scoped, tag = 'scoped memory for tpu_custom_call.1']
    %10 = vsyncpa [#allocation4], 0
    %s11 = scalar_lea.sflag [#allocation4], 1
    %12 = vsyncpa %s11, 0
    %13 = vsyncpa [#allocation7], 0
    %14 = vsyncpa [#allocation5], 0
    %s15 = scalar_lea.sflag [#allocation5], 1
    %16 = vsyncpa %s15, 0
    %17 = vsyncpa [#allocation10], 0
    %s18 = scalar_lea.sflag [#allocation10], 1
    %19 = vsyncpa %s18, 0
    loop: start=0, step=1, limit=4
    $region2: #{tpu_custom_call.1} parent=1 // loop_pre_header
      _
    $region3: #{tpu_custom_call.1} parent=1 // loop_header
      %s21 = sphi 0, %s25
      %p22 = scmp.ge.s32.totalorder %s21, 4
      %s28 = sphi 0, %s40
      %s29 = sphi 0, %s36
      %s30 = sphi 0, %s28
      %s31 = sphi 0, %s29
      %s32 = sphi 0, %s30
      %s33 = sphi 0, %s31
      %s45 = sphi 0, %s47
      %s48 = sphi 0, %s45
      %s49 = sphi 0, %s48
      %s65 = sphi 0, %s49
      %s69 = sphi 0, %s69
      %s71 = sphi 0, %s69
      %s72 = sphi 0, %s71
      %s86 = sphi 0, %s72
      %s90 = sphi 0, %s90
      %s92 = sphi 0, %s90
      %s93 = sphi 0, %s92
      %s107 = sphi 0, %s93
      %s113 = sphi 0, %s115
      %s116 = sphi 0, %s113
      %s117 = sphi 0, %s116
      %s133 = sphi 0, %s117
      %s139 = sphi 0, %s141
      %s142 = sphi 0, %s139
      %s143 = sphi 0, %s142
      %s159 = sphi 0, %s143
    $region4: #{tpu_custom_call.1} parent=1 // loop_header_branch
      %24 = sbr.rel (%p22) target = $region8
    $region5: #{tpu_custom_call.1} parent=1 // loop_body
      %s26 = ssub.s32 %s21, 1
      %s27 = ssub.s32 %s21, 2
      %s34 = sadd.s32 1, %s29
      %p35 = scmp.ge.s32.totalorder %s34, 1
      %s36 = scalar_select %p35, 0, %s34
      %s37 = sadd.s32 1, %s28
      %s38 = scalar_select %p35, %s37, %s28
      %p39 = scmp.ge.s32.totalorder %s38, 2
      %s40 = scalar_select %p39, 0, %s38
      %s41 = ssub.s32 %s28, %s40
      %s42 = ssub.s32 %s29, %s36
      %s43 = sor.u32 %s41, %s42
      %p44 = scmp.eq.s32.totalorder %s43, 0
      %s46 = sadd.s32 %s45, 1
      %s47 = scalar_select %p44, %s45, %s46
      %p50 = pneg %p44
      %p51 = scmp.eq.s32.totalorder %s21, 1
      %p52 = por %p50, %p51
      %p53 = scmp.ne.s32.totalorder %s45, %s48
      %p54 = scmp.eq.s32.totalorder %s21, 0
      %p55 = por %p53, %p54
      %p56 = scmp.ne.s32.totalorder %s45, %s48
      %p57 = scmp.eq.s32.totalorder %s26, 1
      %p58 = por %p56, %p57
      %p59 = scmp.ne.s32.totalorder %s48, %s49
      %p60 = scmp.eq.s32.totalorder %s26, 0
      %p61 = por %p59, %p60
      %p62 = scmp.ne.s32.totalorder %s48, %s49
      %p63 = scmp.eq.s32.totalorder %s27, 1
      %p64 = por %p62, %p63
      %p66 = scmp.ne.s32.totalorder %s49, %s65
      %p67 = scmp.eq.s32.totalorder %s27, 0
      %p68 = por %p66, %p67
      %s70 = sadd.s32 %s69, 1
      %p73 = scmp.eq.s32.totalorder %s21, 1
      %p74 = scmp.ne.s32.totalorder %s69, %s71
      %p75 = scmp.eq.s32.totalorder %s21, 0
      %p76 = por %p74, %p75
      %p77 = scmp.ne.s32.totalorder %s69, %s71
      %p78 = scmp.eq.s32.totalorder %s26, 1
      %p79 = por %p77, %p78
      %p80 = scmp.ne.s32.totalorder %s71, %s72
      %p81 = scmp.eq.s32.totalorder %s26, 0
      %p82 = por %p80, %p81
      %p83 = scmp.ne.s32.totalorder %s71, %s72
      %p84 = scmp.eq.s32.totalorder %s27, 1
      %p85 = por %p83, %p84
      %p87 = scmp.ne.s32.totalorder %s72, %s86
      %p88 = scmp.eq.s32.totalorder %s27, 0
      %p89 = por %p87, %p88
      %s91 = sadd.s32 %s90, 1
      %p94 = scmp.eq.s32.totalorder %s21, 1
      %p95 = scmp.ne.s32.totalorder %s90, %s92
      %p96 = scmp.eq.s32.totalorder %s21, 0
      %p97 = por %p95, %p96
      %p98 = scmp.ne.s32.totalorder %s90, %s92
      %p99 = scmp.eq.s32.totalorder %s26, 1
      %p100 = por %p98, %p99
      %p101 = scmp.ne.s32.totalorder %s92, %s93
      %p102 = scmp.eq.s32.totalorder %s26, 0
      %p103 = por %p101, %p102
      %p104 = scmp.ne.s32.totalorder %s92, %s93
      %p105 = scmp.eq.s32.totalorder %s27, 1
      %p106 = por %p104, %p105
      %p108 = scmp.ne.s32.totalorder %s93, %s107
      %p109 = scmp.eq.s32.totalorder %s27, 0
      %p110 = por %p108, %p109
      %s111 = ssub.s32 %s28, %s40
      %p112 = scmp.eq.s32.totalorder %s111, 0
      %s114 = sadd.s32 %s113, 1
      %s115 = scalar_select %p112, %s113, %s114
      %p118 = pneg %p112
      %p119 = scmp.eq.s32.totalorder %s21, 1
      %p120 = por %p118, %p119
      %p121 = scmp.ne.s32.totalorder %s113, %s116
      %p122 = scmp.eq.s32.totalorder %s21, 0
      %p123 = por %p121, %p122
      %p124 = scmp.ne.s32.totalorder %s113, %s116
      %p125 = scmp.eq.s32.totalorder %s26, 1
      %p126 = por %p124, %p125
      %p127 = scmp.ne.s32.totalorder %s116, %s117
      %p128 = scmp.eq.s32.totalorder %s26, 0
      %p129 = por %p127, %p128
      %p130 = scmp.ne.s32.totalorder %s116, %s117
      %p131 = scmp.eq.s32.totalorder %s27, 1
      %p132 = por %p130, %p131
      %p134 = scmp.ne.s32.totalorder %s117, %s133
      %p135 = scmp.eq.s32.totalorder %s27, 0
      %p136 = por %p134, %p135
      %s137 = ssub.s32 %s28, %s40
      %p138 = scmp.eq.s32.totalorder %s137, 0
      %s140 = sadd.s32 %s139, 1
      %s141 = scalar_select %p138, %s139, %s140
      %p144 = pneg %p138
      %p145 = scmp.eq.s32.totalorder %s21, 1
      %p146 = por %p144, %p145
      %p147 = scmp.ne.s32.totalorder %s139, %s142
      %p148 = scmp.eq.s32.totalorder %s21, 0
      %p149 = por %p147, %p148
      %p150 = scmp.ne.s32.totalorder %s139, %s142
      %p151 = scmp.eq.s32.totalorder %s26, 1
      %p152 = por %p150, %p151
      %p153 = scmp.ne.s32.totalorder %s142, %s143
      %p154 = scmp.eq.s32.totalorder %s26, 0
      %p155 = por %p153, %p154
      %p156 = scmp.ne.s32.totalorder %s142, %s143
      %p157 = scmp.eq.s32.totalorder %s27, 1
      %p158 = por %p156, %p157
      %p160 = scmp.ne.s32.totalorder %s143, %s159
      %p161 = scmp.eq.s32.totalorder %s27, 0
      %p162 = por %p160, %p161
      %p163 = scmp.le.s32.totalorder 1, %s21
      %p164 = scmp.lt.s32.totalorder %s21, 3
      %p165 = pnand %p163, %p164
      %p166 = pneg %p165
      // Predicated region
      $region9: #{tpu_custom_call.1} parent=5 // pred_check
        _
      $region10: #{tpu_custom_call.1} parent=5 // pred_check_branch
        %168 = sbr.rel (%p165) target = $region12
      $region11: #{tpu_custom_call.1} parent=5 // pred_region
        %s169 = ssub.s32 %s21, 1
        // Predicated region
        $region13: #{tpu_custom_call.1} parent=11 // pred_check
          %p170 = pneg %p82
        $region14: #{tpu_custom_call.1} parent=11 // pred_check_branch
          %172 = sbr.rel (%p170) target = $region16
        $region15: #{tpu_custom_call.1} parent=11 // pred_region
          _
        $region16: #{tpu_custom_call.1} parent=11 // pred_fallthru
          _
        // Predicated region
        $region17: #{tpu_custom_call.1} parent=11 // pred_check
          %p173 = pneg %p103
        $region18: #{tpu_custom_call.1} parent=11 // pred_check_branch
          %175 = sbr.rel (%p173) target = $region20
        $region19: #{tpu_custom_call.1} parent=11 // pred_region
          %s177 = ssub.s32 16, 16
          %178 = vsyncadd [#allocation7], %s177
          %s180 = sshll.u32 [#allocation6], 4
          %s181 = int_to_ptr.vmem [resolvable:$true] %s180
          %183 = dma.hbm_to_vmem [thread:$0]  %s2, 16, %s181, [#allocation7]
        $region20: #{tpu_custom_call.1} parent=11 // pred_fallthru
          _
      $region12: #{tpu_custom_call.1} parent=5 // pred_fallthru
        _
      %p184 = scmp.lt.s32.totalorder %s21, 2
      // Predicated region
      $region21: #{tpu_custom_call.1} parent=5 // pred_check
        %p185 = pneg %p184
      $region22: #{tpu_custom_call.1} parent=5 // pred_check_branch
        %187 = sbr.rel (%p185) target = $region24
      $region23: #{tpu_custom_call.1} parent=5 // pred_region
        // Predicated region
        $region25: #{tpu_custom_call.1} parent=23 // pred_check
          %p188 = pneg %p55
        $region26: #{tpu_custom_call.1} parent=23 // pred_check_branch
          %190 = sbr.rel (%p188) target = $region28
        $region27: #{tpu_custom_call.1} parent=23 // pred_region
          %s191 = sand.u32 %s45, 1
          %s192 = scalar_lea.sflag [#allocation4], %s191
          %s193 = sand.u32 %s45, 1
          %s194 = smul.addr %s193, 2048
          %s195 = scalar_lea.vmem [#allocation3], %s194
          %s196 = smul.u32 8, %s28
          %s197 = smul.u32 2, %s29
          %s199 = ssub.s32 32768, 32768
          %200 = vsyncadd %s192, %s199
          %s201 = smul.addr %s197, 16
          %s202 = smul.addr %s196, 32
          %s203 = sadd.s32 %s201, %s202
          %s204 = smul.addr %s203, 128
          %s205 = scalar_lea.hbm %s0, %s204
          %s206 = sshll.u32 %s195, 4
          %s207 = int_to_ptr.vmem [resolvable:$true] %s206
          %212 = dma.hbm_to_vmem [thread:$0]  %s205, 32768, %s207, %s192, 2048, 2048, 128
        $region28: #{tpu_custom_call.1} parent=23 // pred_fallthru
          _
      $region24: #{tpu_custom_call.1} parent=5 // pred_fallthru
        _
      %p213 = scmp.le.s32.totalorder 1, %s21
      %p214 = scmp.lt.s32.totalorder %s21, 3
      %p215 = pnand %p213, %p214
      %p216 = pneg %p215
      // Predicated region
      $region29: #{tpu_custom_call.1} parent=5 // pred_check
        _
      $region30: #{tpu_custom_call.1} parent=5 // pred_check_branch
        %218 = sbr.rel (%p215) target = $region32
      $region31: #{tpu_custom_call.1} parent=5 // pred_region
        %s219 = ssub.s32 %s21, 1
        %s220 = sand.u32 %s48, 1
        %s221 = scalar_lea.sflag [#allocation4], %s220
        %s222 = sand.u32 %s48, 1
        %s223 = smul.addr %s222, 2048
        %s224 = scalar_lea.vmem [#allocation3], %s223
        // Predicated region
        $region33: #{tpu_custom_call.1} parent=31 // pred_check
          %p225 = pneg %p61
        $region34: #{tpu_custom_call.1} parent=31 // pred_check_branch
          %227 = sbr.rel (%p225) target = $region36
        $region35: #{tpu_custom_call.1} parent=31 // pred_region
          %228 = dma.done %s221, 32768
        $region36: #{tpu_custom_call.1} parent=31 // pred_fallthru
          _
        // Predicated region
        $region37: #{tpu_custom_call.1} parent=31 // pred_check
          %p229 = pneg %p103
        $region38: #{tpu_custom_call.1} parent=31 // pred_check_branch
          %231 = sbr.rel (%p229) target = $region40
        $region39: #{tpu_custom_call.1} parent=31 // pred_region
          %232 = dma.done [#allocation7], 16
        $region40: #{tpu_custom_call.1} parent=31 // pred_fallthru
          _
        %s233 = sand.u32 %s48, 1
        %s234 = scalar_lea.sflag [#allocation4], %s233
        %s235 = sand.u32 %s48, 1
        %s236 = smul.addr %s235, 2048
        %s237 = scalar_lea.vmem [#allocation3], %s236
        %p238 = pneg %p61
        %p239 = pneg %p58
        %p240 = pneg %p82
        %p241 = pneg %p79
        %p242 = pneg %p103
        %p243 = pneg %p100
        %p244 = pneg %p129
        %p245 = pneg %p126
        %s246 = sand.u32 %s116, 1
        %s247 = scalar_lea.sflag [#allocation5], %s246
        %s248 = sand.u32 %s116, 1
        %s249 = smul.addr %s248, 8
        %s250 = scalar_lea.vmem [#allocation8], %s249
        %p251 = pneg %p155
        %p252 = pneg %p152
        %s253 = sand.u32 %s142, 1
        %s254 = scalar_lea.sflag [#allocation10], %s253
        %s255 = sand.u32 %s142, 1
        %s256 = smul.addr %s255, 128
        %s257 = scalar_lea.vmem [#allocation9], %s256
        %s258 = smul.u32 8, %s30
        %s259 = smul.u32 2, %s31
        %p260 = scmp.eq.s32.totalorder %s31, 0
        // Predicated region
        $region41: #{tpu_custom_call.1} parent=31 // pred_check
          %p261 = pneg %p260
        $region42: #{tpu_custom_call.1} parent=31 // pred_check_branch
          %263 = sbr.rel (%p261) target = $region44
        $region43: #{tpu_custom_call.1} parent=31 // pred_region
          %264 = vst [vmem:[#allocation2] sm:$0xff] 0.0
          %265 = vst [vmem:[#allocation2 + $0x8] sm:$0xff] 0.0
          %266 = vst [vmem:[#allocation2 + $0x10] sm:$0xff] 0.0
          %267 = vst [vmem:[#allocation2 + $0x18] sm:$0xff] 0.0
          %268 = vst [vmem:[#allocation2 + $0x20] sm:$0xff] 0.0
          %269 = vst [vmem:[#allocation2 + $0x28] sm:$0xff] 0.0
          %270 = vst [vmem:[#allocation2 + $0x30] sm:$0xff] 0.0
          %271 = vst [vmem:[#allocation2 + $0x38] sm:$0xff] 0.0
          %272 = vst [vmem:[#allocation2 + $0x40] sm:$0xff] 0.0
          %273 = vst [vmem:[#allocation2 + $0x48] sm:$0xff] 0.0
          %274 = vst [vmem:[#allocation2 + $0x50] sm:$0xff] 0.0
          %275 = vst [vmem:[#allocation2 + $0x58] sm:$0xff] 0.0
          %276 = vst [vmem:[#allocation2 + $0x60] sm:$0xff] 0.0
          %277 = vst [vmem:[#allocation2 + $0x68] sm:$0xff] 0.0
          %278 = vst [vmem:[#allocation2 + $0x70] sm:$0xff] 0.0
          %279 = vst [vmem:[#allocation2 + $0x78] sm:$0xff] 0.0
        $region44: #{tpu_custom_call.1} parent=31 // pred_fallthru
          _
        %v280 = vld [vmem:[#allocation2] sm:$0xff]
        %v281 = vld [vmem:[#allocation2 + $0x8] sm:$0xff]
        %v282 = vld [vmem:[#allocation2 + $0x10] sm:$0xff]
        %v283 = vld [vmem:[#allocation2 + $0x18] sm:$0xff]
        %v284 = vld [vmem:[#allocation2 + $0x20] sm:$0xff]
        %v285 = vld [vmem:[#allocation2 + $0x28] sm:$0xff]
        %v286 = vld [vmem:[#allocation2 + $0x30] sm:$0xff]
        %v287 = vld [vmem:[#allocation2 + $0x38] sm:$0xff]
        %v288 = vld [vmem:[#allocation2 + $0x40] sm:$0xff]
        %v289 = vld [vmem:[#allocation2 + $0x48] sm:$0xff]
        %v290 = vld [vmem:[#allocation2 + $0x50] sm:$0xff]
        %v291 = vld [vmem:[#allocation2 + $0x58] sm:$0xff]
        %v292 = vld [vmem:[#allocation2 + $0x60] sm:$0xff]
        %v293 = vld [vmem:[#allocation2 + $0x68] sm:$0xff]
        %v294 = vld [vmem:[#allocation2 + $0x70] sm:$0xff]
        %v295 = vld [vmem:[#allocation2 + $0x78] sm:$0xff]
        %v296 = vld [vmem:[%s224] sm:$0xff]
        %v297 = vld [vmem:[%s224 + $0x8] sm:$0xff]
        %v298 = vld [vmem:[%s224 + $0x10] sm:$0xff]
        %v299 = vld [vmem:[%s224 + $0x18] sm:$0xff]
        %v300 = vld [vmem:[%s224 + $0x20] sm:$0xff]
        %v301 = vld [vmem:[%s224 + $0x28] sm:$0xff]
        %v302 = vld [vmem:[%s224 + $0x30] sm:$0xff]
        %v303 = vld [vmem:[%s224 + $0x38] sm:$0xff]
        %v304 = vld [vmem:[%s224 + $0x40] sm:$0xff]
        %v305 = vld [vmem:[%s224 + $0x48] sm:$0xff]
        %v306 = vld [vmem:[%s224 + $0x50] sm:$0xff]
        %v307 = vld [vmem:[%s224 + $0x58] sm:$0xff]
        %v308 = vld [vmem:[%s224 + $0x60] sm:$0xff]
        %v309 = vld [vmem:[%s224 + $0x68] sm:$0xff]
        %v310 = vld [vmem:[%s224 + $0x70] sm:$0xff]
        %v311 = vld [vmem:[%s224 + $0x78] sm:$0xff]
        %v312 = vld [vmem:[%s224 + $0x80] sm:$0xff]
        %v313 = vld [vmem:[%s224 + $0x88] sm:$0xff]
        %v314 = vld [vmem:[%s224 + $0x90] sm:$0xff]
        %v315 = vld [vmem:[%s224 + $0x98] sm:$0xff]
        %v316 = vld [vmem:[%s224 + $0xa0] sm:$0xff]
        %v317 = vld [vmem:[%s224 + $0xa8] sm:$0xff]
        %v318 = vld [vmem:[%s224 + $0xb0] sm:$0xff]
        %v319 = vld [vmem:[%s224 + $0xb8] sm:$0xff]
        %v320 = vld [vmem:[%s224 + $0xc0] sm:$0xff]
        %v321 = vld [vmem:[%s224 + $0xc8] sm:$0xff]
        %v322 = vld [vmem:[%s224 + $0xd0] sm:$0xff]
        %v323 = vld [vmem:[%s224 + $0xd8] sm:$0xff]
        %v324 = vld [vmem:[%s224 + $0xe0] sm:$0xff]
        %v325 = vld [vmem:[%s224 + $0xe8] sm:$0xff]
        %v326 = vld [vmem:[%s224 + $0xf0] sm:$0xff]
        %v327 = vld [vmem:[%s224 + $0xf8] sm:$0xff]
        %v328 = vld [vmem:[%s224 + $0x100] sm:$0xff]
        %v329 = vld [vmem:[%s224 + $0x108] sm:$0xff]
        %v330 = vld [vmem:[%s224 + $0x110] sm:$0xff]
        %v331 = vld [vmem:[%s224 + $0x118] sm:$0xff]
        %v332 = vld [vmem:[%s224 + $0x120] sm:$0xff]
        %v333 = vld [vmem:[%s224 + $0x128] sm:$0xff]
        %v334 = vld [vmem:[%s224 + $0x130] sm:$0xff]
        %v335 = vld [vmem:[%s224 + $0x138] sm:$0xff]
        %v336 = vld [vmem:[%s224 + $0x140] sm:$0xff]
        %v337 = vld [vmem:[%s224 + $0x148] sm:$0xff]
        %v338 = vld [vmem:[%s224 + $0x150] sm:$0xff]
        %v339 = vld [vmem:[%s224 + $0x158] sm:$0xff]
        %v340 = vld [vmem:[%s224 + $0x160] sm:$0xff]
        %v341 = vld [vmem:[%s224 + $0x168] sm:$0xff]
        %v342 = vld [vmem:[%s224 + $0x170] sm:$0xff]
        %v343 = vld [vmem:[%s224 + $0x178] sm:$0xff]
        %v344 = vld [vmem:[%s224 + $0x180] sm:$0xff]
        %v345 = vld [vmem:[%s224 + $0x188] sm:$0xff]
        %v346 = vld [vmem:[%s224 + $0x190] sm:$0xff]
        %v347 = vld [vmem:[%s224 + $0x198] sm:$0xff]
        %v348 = vld [vmem:[%s224 + $0x1a0] sm:$0xff]
        %v349 = vld [vmem:[%s224 + $0x1a8] sm:$0xff]
        %v350 = vld [vmem:[%s224 + $0x1b0] sm:$0xff]
        %v351 = vld [vmem:[%s224 + $0x1b8] sm:$0xff]
        %v352 = vld [vmem:[%s224 + $0x1c0] sm:$0xff]
        %v353 = vld [vmem:[%s224 + $0x1c8] sm:$0xff]
        %v354 = vld [vmem:[%s224 + $0x1d0] sm:$0xff]
        %v355 = vld [vmem:[%s224 + $0x1d8] sm:$0xff]
        %v356 = vld [vmem:[%s224 + $0x1e0] sm:$0xff]
        %v357 = vld [vmem:[%s224 + $0x1e8] sm:$0xff]
        %v358 = vld [vmem:[%s224 + $0x1f0] sm:$0xff]
        %v359 = vld [vmem:[%s224 + $0x1f8] sm:$0xff]
        %v360 = vld [vmem:[%s224 + $0x200] sm:$0xff]
        %v361 = vld [vmem:[%s224 + $0x208] sm:$0xff]
        %v362 = vld [vmem:[%s224 + $0x210] sm:$0xff]
        %v363 = vld [vmem:[%s224 + $0x218] sm:$0xff]
        %v364 = vld [vmem:[%s224 + $0x220] sm:$0xff]
        %v365 = vld [vmem:[%s224 + $0x228] sm:$0xff]
        %v366 = vld [vmem:[%s224 + $0x230] sm:$0xff]
        %v367 = vld [vmem:[%s224 + $0x238] sm:$0xff]
        %v368 = vld [vmem:[%s224 + $0x240] sm:$0xff]
        %v369 = vld [vmem:[%s224 + $0x248] sm:$0xff]
        %v370 = vld [vmem:[%s224 + $0x250] sm:$0xff]
        %v371 = vld [vmem:[%s224 + $0x258] sm:$0xff]
        %v372 = vld [vmem:[%s224 + $0x260] sm:$0xff]
        %v373 = vld [vmem:[%s224 + $0x268] sm:$0xff]
        %v374 = vld [vmem:[%s224 + $0x270] sm:$0xff]
        %v375 = vld [vmem:[%s224 + $0x278] sm:$0xff]
        %v376 = vld [vmem:[%s224 + $0x280] sm:$0xff]
        %v377 = vld [vmem:[%s224 + $0x288] sm:$0xff]
        %v378 = vld [vmem:[%s224 + $0x290] sm:$0xff]
        %v379 = vld [vmem:[%s224 + $0x298] sm:$0xff]
        %v380 = vld [vmem:[%s224 + $0x2a0] sm:$0xff]
        %v381 = vld [vmem:[%s224 + $0x2a8] sm:$0xff]
        %v382 = vld [vmem:[%s224 + $0x2b0] sm:$0xff]
        %v383 = vld [vmem:[%s224 + $0x2b8] sm:$0xff]
        %v384 = vld [vmem:[%s224 + $0x2c0] sm:$0xff]
        %v385 = vld [vmem:[%s224 + $0x2c8] sm:$0xff]
        %v386 = vld [vmem:[%s224 + $0x2d0] sm:$0xff]
        %v387 = vld [vmem:[%s224 + $0x2d8] sm:$0xff]
        %v388 = vld [vmem:[%s224 + $0x2e0] sm:$0xff]
        %v389 = vld [vmem:[%s224 + $0x2e8] sm:$0xff]
        %v390 = vld [vmem:[%s224 + $0x2f0] sm:$0xff]
        %v391 = vld [vmem:[%s224 + $0x2f8] sm:$0xff]
        %v392 = vld [vmem:[%s224 + $0x300] sm:$0xff]
        %v393 = vld [vmem:[%s224 + $0x308] sm:$0xff]
        %v394 = vld [vmem:[%s224 + $0x310] sm:$0xff]
        %v395 = vld [vmem:[%s224 + $0x318] sm:$0xff]
        %v396 = vld [vmem:[%s224 + $0x320] sm:$0xff]
        %v397 = vld [vmem:[%s224 + $0x328] sm:$0xff]
        %v398 = vld [vmem:[%s224 + $0x330] sm:$0xff]
        %v399 = vld [vmem:[%s224 + $0x338] sm:$0xff]
        %v400 = vld [vmem:[%s224 + $0x340] sm:$0xff]
        %v401 = vld [vmem:[%s224 + $0x348] sm:$0xff]
        %v402 = vld [vmem:[%s224 + $0x350] sm:$0xff]
        %v403 = vld [vmem:[%s224 + $0x358] sm:$0xff]
        %v404 = vld [vmem:[%s224 + $0x360] sm:$0xff]
        %v405 = vld [vmem:[%s224 + $0x368] sm:$0xff]
        %v406 = vld [vmem:[%s224 + $0x370] sm:$0xff]
        %v407 = vld [vmem:[%s224 + $0x378] sm:$0xff]
        %v408 = vld [vmem:[%s224 + $0x380] sm:$0xff]
        %v409 = vld [vmem:[%s224 + $0x388] sm:$0xff]
        %v410 = vld [vmem:[%s224 + $0x390] sm:$0xff]
        %v411 = vld [vmem:[%s224 + $0x398] sm:$0xff]
        %v412 = vld [vmem:[%s224 + $0x3a0] sm:$0xff]
        %v413 = vld [vmem:[%s224 + $0x3a8] sm:$0xff]
        %v414 = vld [vmem:[%s224 + $0x3b0] sm:$0xff]
        %v415 = vld [vmem:[%s224 + $0x3b8] sm:$0xff]
        %v416 = vld [vmem:[%s224 + $0x3c0] sm:$0xff]
        %v417 = vld [vmem:[%s224 + $0x3c8] sm:$0xff]
        %v418 = vld [vmem:[%s224 + $0x3d0] sm:$0xff]
        %v419 = vld [vmem:[%s224 + $0x3d8] sm:$0xff]
        %v420 = vld [vmem:[%s224 + $0x3e0] sm:$0xff]
        %v421 = vld [vmem:[%s224 + $0x3e8] sm:$0xff]
        %v422 = vld [vmem:[%s224 + $0x3f0] sm:$0xff]
        %v423 = vld [vmem:[%s224 + $0x3f8] sm:$0xff]
        %v424 = vld [vmem:[%s224 + $0x400] sm:$0xff]
        %v425 = vld [vmem:[%s224 + $0x408] sm:$0xff]
        %v426 = vld [vmem:[%s224 + $0x410] sm:$0xff]
        %v427 = vld [vmem:[%s224 + $0x418] sm:$0xff]
        %v428 = vld [vmem:[%s224 + $0x420] sm:$0xff]
        %v429 = vld [vmem:[%s224 + $0x428] sm:$0xff]
        %v430 = vld [vmem:[%s224 + $0x430] sm:$0xff]
        %v431 = vld [vmem:[%s224 + $0x438] sm:$0xff]
        %v432 = vld [vmem:[%s224 + $0x440] sm:$0xff]
        %v433 = vld [vmem:[%s224 + $0x448] sm:$0xff]
        %v434 = vld [vmem:[%s224 + $0x450] sm:$0xff]
        %v435 = vld [vmem:[%s224 + $0x458] sm:$0xff]
        %v436 = vld [vmem:[%s224 + $0x460] sm:$0xff]
        %v437 = vld [vmem:[%s224 + $0x468] sm:$0xff]
        %v438 = vld [vmem:[%s224 + $0x470] sm:$0xff]
        %v439 = vld [vmem:[%s224 + $0x478] sm:$0xff]
        %v440 = vld [vmem:[%s224 + $0x480] sm:$0xff]
        %v441 = vld [vmem:[%s224 + $0x488] sm:$0xff]
        %v442 = vld [vmem:[%s224 + $0x490] sm:$0xff]
        %v443 = vld [vmem:[%s224 + $0x498] sm:$0xff]
        %v444 = vld [vmem:[%s224 + $0x4a0] sm:$0xff]
        %v445 = vld [vmem:[%s224 + $0x4a8] sm:$0xff]
        %v446 = vld [vmem:[%s224 + $0x4b0] sm:$0xff]
        %v447 = vld [vmem:[%s224 + $0x4b8] sm:$0xff]
        %v448 = vld [vmem:[%s224 + $0x4c0] sm:$0xff]
        %v449 = vld [vmem:[%s224 + $0x4c8] sm:$0xff]
        %v450 = vld [vmem:[%s224 + $0x4d0] sm:$0xff]
        %v451 = vld [vmem:[%s224 + $0x4d8] sm:$0xff]
        %v452 = vld [vmem:[%s224 + $0x4e0] sm:$0xff]
        %v453 = vld [vmem:[%s224 + $0x4e8] sm:$0xff]
        %v454 = vld [vmem:[%s224 + $0x4f0] sm:$0xff]
        %v455 = vld [vmem:[%s224 + $0x4f8] sm:$0xff]
        %v456 = vld [vmem:[%s224 + $0x500] sm:$0xff]
        %v457 = vld [vmem:[%s224 + $0x508] sm:$0xff]
        %v458 = vld [vmem:[%s224 + $0x510] sm:$0xff]
        %v459 = vld [vmem:[%s224 + $0x518] sm:$0xff]
        %v460 = vld [vmem:[%s224 + $0x520] sm:$0xff]
        %v461 = vld [vmem:[%s224 + $0x528] sm:$0xff]
        %v462 = vld [vmem:[%s224 + $0x530] sm:$0xff]
        %v463 = vld [vmem:[%s224 + $0x538] sm:$0xff]
        %v464 = vld [vmem:[%s224 + $0x540] sm:$0xff]
        %v465 = vld [vmem:[%s224 + $0x548] sm:$0xff]
        %v466 = vld [vmem:[%s224 + $0x550] sm:$0xff]
        %v467 = vld [vmem:[%s224 + $0x558] sm:$0xff]
        %v468 = vld [vmem:[%s224 + $0x560] sm:$0xff]
        %v469 = vld [vmem:[%s224 + $0x568] sm:$0xff]
        %v470 = vld [vmem:[%s224 + $0x570] sm:$0xff]
        %v471 = vld [vmem:[%s224 + $0x578] sm:$0xff]
        %v472 = vld [vmem:[%s224 + $0x580] sm:$0xff]
        %v473 = vld [vmem:[%s224 + $0x588] sm:$0xff]
        %v474 = vld [vmem:[%s224 + $0x590] sm:$0xff]
        %v475 = vld [vmem:[%s224 + $0x598] sm:$0xff]
        %v476 = vld [vmem:[%s224 + $0x5a0] sm:$0xff]
        %v477 = vld [vmem:[%s224 + $0x5a8] sm:$0xff]
        %v478 = vld [vmem:[%s224 + $0x5b0] sm:$0xff]
        %v479 = vld [vmem:[%s224 + $0x5b8] sm:$0xff]
        %v480 = vld [vmem:[%s224 + $0x5c0] sm:$0xff]
        %v481 = vld [vmem:[%s224 + $0x5c8] sm:$0xff]
        %v482 = vld [vmem:[%s224 + $0x5d0] sm:$0xff]
        %v483 = vld [vmem:[%s224 + $0x5d8] sm:$0xff]
        %v484 = vld [vmem:[%s224 + $0x5e0] sm:$0xff]
        %v485 = vld [vmem:[%s224 + $0x5e8] sm:$0xff]
        %v486 = vld [vmem:[%s224 + $0x5f0] sm:$0xff]
        %v487 = vld [vmem:[%s224 + $0x5f8] sm:$0xff]
        %v488 = vld [vmem:[%s224 + $0x600] sm:$0xff]
        %v489 = vld [vmem:[%s224 + $0x608] sm:$0xff]
        %v490 = vld [vmem:[%s224 + $0x610] sm:$0xff]
        %v491 = vld [vmem:[%s224 + $0x618] sm:$0xff]
        %v492 = vld [vmem:[%s224 + $0x620] sm:$0xff]
        %v493 = vld [vmem:[%s224 + $0x628] sm:$0xff]
        %v494 = vld [vmem:[%s224 + $0x630] sm:$0xff]
        %v495 = vld [vmem:[%s224 + $0x638] sm:$0xff]
        %v496 = vld [vmem:[%s224 + $0x640] sm:$0xff]
        %v497 = vld [vmem:[%s224 + $0x648] sm:$0xff]
        %v498 = vld [vmem:[%s224 + $0x650] sm:$0xff]
        %v499 = vld [vmem:[%s224 + $0x658] sm:$0xff]
        %v500 = vld [vmem:[%s224 + $0x660] sm:$0xff]
        %v501 = vld [vmem:[%s224 + $0x668] sm:$0xff]
        %v502 = vld [vmem:[%s224 + $0x670] sm:$0xff]
        %v503 = vld [vmem:[%s224 + $0x678] sm:$0xff]
        %v504 = vld [vmem:[%s224 + $0x680] sm:$0xff]
        %v505 = vld [vmem:[%s224 + $0x688] sm:$0xff]
        %v506 = vld [vmem:[%s224 + $0x690] sm:$0xff]
        %v507 = vld [vmem:[%s224 + $0x698] sm:$0xff]
        %v508 = vld [vmem:[%s224 + $0x6a0] sm:$0xff]
        %v509 = vld [vmem:[%s224 + $0x6a8] sm:$0xff]
        %v510 = vld [vmem:[%s224 + $0x6b0] sm:$0xff]
        %v511 = vld [vmem:[%s224 + $0x6b8] sm:$0xff]
        %v512 = vld [vmem:[%s224 + $0x6c0] sm:$0xff]
        %v513 = vld [vmem:[%s224 + $0x6c8] sm:$0xff]
        %v514 = vld [vmem:[%s224 + $0x6d0] sm:$0xff]
        %v515 = vld [vmem:[%s224 + $0x6d8] sm:$0xff]
        %v516 = vld [vmem:[%s224 + $0x6e0] sm:$0xff]
        %v517 = vld [vmem:[%s224 + $0x6e8] sm:$0xff]
        %v518 = vld [vmem:[%s224 + $0x6f0] sm:$0xff]
        %v519 = vld [vmem:[%s224 + $0x6f8] sm:$0xff]
        %v520 = vld [vmem:[%s224 + $0x700] sm:$0xff]
        %v521 = vld [vmem:[%s224 + $0x708] sm:$0xff]
        %v522 = vld [vmem:[%s224 + $0x710] sm:$0xff]
        %v523 = vld [vmem:[%s224 + $0x718] sm:$0xff]
        %v524 = vld [vmem:[%s224 + $0x720] sm:$0xff]
        %v525 = vld [vmem:[%s224 + $0x728] sm:$0xff]
        %v526 = vld [vmem:[%s224 + $0x730] sm:$0xff]
        %v527 = vld [vmem:[%s224 + $0x738] sm:$0xff]
        %v528 = vld [vmem:[%s224 + $0x740] sm:$0xff]
        %v529 = vld [vmem:[%s224 + $0x748] sm:$0xff]
        %v530 = vld [vmem:[%s224 + $0x750] sm:$0xff]
        %v531 = vld [vmem:[%s224 + $0x758] sm:$0xff]
        %v532 = vld [vmem:[%s224 + $0x760] sm:$0xff]
        %v533 = vld [vmem:[%s224 + $0x768] sm:$0xff]
        %v534 = vld [vmem:[%s224 + $0x770] sm:$0xff]
        %v535 = vld [vmem:[%s224 + $0x778] sm:$0xff]
        %v536 = vld [vmem:[%s224 + $0x780] sm:$0xff]
        %v537 = vld [vmem:[%s224 + $0x788] sm:$0xff]
        %v538 = vld [vmem:[%s224 + $0x790] sm:$0xff]
        %v539 = vld [vmem:[%s224 + $0x798] sm:$0xff]
        %v540 = vld [vmem:[%s224 + $0x7a0] sm:$0xff]
        %v541 = vld [vmem:[%s224 + $0x7a8] sm:$0xff]
        %v542 = vld [vmem:[%s224 + $0x7b0] sm:$0xff]
        %v543 = vld [vmem:[%s224 + $0x7b8] sm:$0xff]
        %v544 = vld [vmem:[%s224 + $0x7c0] sm:$0xff]
        %v545 = vld [vmem:[%s224 + $0x7c8] sm:$0xff]
        %v546 = vld [vmem:[%s224 + $0x7d0] sm:$0xff]
        %v547 = vld [vmem:[%s224 + $0x7d8] sm:$0xff]
        %v548 = vld [vmem:[%s224 + $0x7e0] sm:$0xff]
        %v549 = vld [vmem:[%s224 + $0x7e8] sm:$0xff]
        %v550 = vld [vmem:[%s224 + $0x7f0] sm:$0xff]
        %v551 = vld [vmem:[%s224 + $0x7f8] sm:$0xff]
        %v552 = vadd.f32 %v296, %v312
        %v553 = vrot.slane %v552, 4
        %v554 = vadd.f32 %v552, %v553
        %v555 = vrot.slane %v554, 2
        %v556 = vadd.f32 %v554, %v555
        %v557 = vrot.slane %v556, 1
        %v558 = vadd.f32 %v556, %v557
        %v559 = vadd.f32 %v297, %v313
        %v560 = vrot.slane %v559, 4
        %v561 = vadd.f32 %v559, %v560
        %v562 = vrot.slane %v561, 2
        %v563 = vadd.f32 %v561, %v562
        %v564 = vrot.slane %v563, 1
        %v565 = vadd.f32 %v563, %v564
        %v566 = vadd.f32 %v298, %v314
        %v567 = vrot.slane %v566, 4
        %v568 = vadd.f32 %v566, %v567
        %v569 = vrot.slane %v568, 2
        %v570 = vadd.f32 %v568, %v569
        %v571 = vrot.slane %v570, 1
        %v572 = vadd.f32 %v570, %v571
        %v573 = vadd.f32 %v299, %v315
        %v574 = vrot.slane %v573, 4
        %v575 = vadd.f32 %v573, %v574
        %v576 = vrot.slane %v575, 2
        %v577 = vadd.f32 %v575, %v576
        %v578 = vrot.slane %v577, 1
        %v579 = vadd.f32 %v577, %v578
        %v580 = vadd.f32 %v300, %v316
        %v581 = vrot.slane %v580, 4
        %v582 = vadd.f32 %v580, %v581
        %v583 = vrot.slane %v582, 2
        %v584 = vadd.f32 %v582, %v583
        %v585 = vrot.slane %v584, 1
        %v586 = vadd.f32 %v584, %v585
        %v587 = vadd.f32 %v301, %v317
        %v588 = vrot.slane %v587, 4
        %v589 = vadd.f32 %v587, %v588
        %v590 = vrot.slane %v589, 2
        %v591 = vadd.f32 %v589, %v590
        %v592 = vrot.slane %v591, 1
        %v593 = vadd.f32 %v591, %v592
        %v594 = vadd.f32 %v302, %v318
        %v595 = vrot.slane %v594, 4
        %v596 = vadd.f32 %v594, %v595
        %v597 = vrot.slane %v596, 2
        %v598 = vadd.f32 %v596, %v597
        %v599 = vrot.slane %v598, 1
        %v600 = vadd.f32 %v598, %v599
        %v601 = vadd.f32 %v303, %v319
        %v602 = vrot.slane %v601, 4
        %v603 = vadd.f32 %v601, %v602
        %v604 = vrot.slane %v603, 2
        %v605 = vadd.f32 %v603, %v604
        %v606 = vrot.slane %v605, 1
        %v607 = vadd.f32 %v605, %v606
        %v608 = vadd.f32 %v304, %v320
        %v609 = vrot.slane %v608, 4
        %v610 = vadd.f32 %v608, %v609
        %v611 = vrot.slane %v610, 2
        %v612 = vadd.f32 %v610, %v611
        %v613 = vrot.slane %v612, 1
        %v614 = vadd.f32 %v612, %v613
        %v615 = vadd.f32 %v305, %v321
        %v616 = vrot.slane %v615, 4
        %v617 = vadd.f32 %v615, %v616
        %v618 = vrot.slane %v617, 2
        %v619 = vadd.f32 %v617, %v618
        %v620 = vrot.slane %v619, 1
        %v621 = vadd.f32 %v619, %v620
        %v622 = vadd.f32 %v306, %v322
        %v623 = vrot.slane %v622, 4
        %v624 = vadd.f32 %v622, %v623
        %v625 = vrot.slane %v624, 2
        %v626 = vadd.f32 %v624, %v625
        %v627 = vrot.slane %v626, 1
        %v628 = vadd.f32 %v626, %v627
        %v629 = vadd.f32 %v307, %v323
        %v630 = vrot.slane %v629, 4
        %v631 = vadd.f32 %v629, %v630
        %v632 = vrot.slane %v631, 2
        %v633 = vadd.f32 %v631, %v632
        %v634 = vrot.slane %v633, 1
        %v635 = vadd.f32 %v633, %v634
        %v636 = vadd.f32 %v308, %v324
        %v637 = vrot.slane %v636, 4
        %v638 = vadd.f32 %v636, %v637
        %v639 = vrot.slane %v638, 2
        %v640 = vadd.f32 %v638, %v639
        %v641 = vrot.slane %v640, 1
        %v642 = vadd.f32 %v640, %v641
        %v643 = vadd.f32 %v309, %v325
        %v644 = vrot.slane %v643, 4
        %v645 = vadd.f32 %v643, %v644
        %v646 = vrot.slane %v645, 2
        %v647 = vadd.f32 %v645, %v646
        %v648 = vrot.slane %v647, 1
        %v649 = vadd.f32 %v647, %v648
        %v650 = vadd.f32 %v310, %v326
        %v651 = vrot.slane %v650, 4
        %v652 = vadd.f32 %v650, %v651
        %v653 = vrot.slane %v652, 2
        %v654 = vadd.f32 %v652, %v653
        %v655 = vrot.slane %v654, 1
        %v656 = vadd.f32 %v654, %v655
        %v657 = vadd.f32 %v311, %v327
        %v658 = vrot.slane %v657, 4
        %v659 = vadd.f32 %v657, %v658
        %v660 = vrot.slane %v659, 2
        %v661 = vadd.f32 %v659, %v660
        %v662 = vrot.slane %v661, 1
        %v663 = vadd.f32 %v661, %v662
        %v664 = vadd.f32 %v328, %v344
        %v665 = vrot.slane %v664, 4
        %v666 = vadd.f32 %v664, %v665
        %v667 = vrot.slane %v666, 2
        %v668 = vadd.f32 %v666, %v667
        %v669 = vrot.slane %v668, 1
        %v670 = vadd.f32 %v668, %v669
        %v671 = vadd.f32 %v329, %v345
        %v672 = vrot.slane %v671, 4
        %v673 = vadd.f32 %v671, %v672
        %v674 = vrot.slane %v673, 2
        %v675 = vadd.f32 %v673, %v674
        %v676 = vrot.slane %v675, 1
        %v677 = vadd.f32 %v675, %v676
        %v678 = vadd.f32 %v330, %v346
        %v679 = vrot.slane %v678, 4
        %v680 = vadd.f32 %v678, %v679
        %v681 = vrot.slane %v680, 2
        %v682 = vadd.f32 %v680, %v681
        %v683 = vrot.slane %v682, 1
        %v684 = vadd.f32 %v682, %v683
        %v685 = vadd.f32 %v331, %v347
        %v686 = vrot.slane %v685, 4
        %v687 = vadd.f32 %v685, %v686
        %v688 = vrot.slane %v687, 2
        %v689 = vadd.f32 %v687, %v688
        %v690 = vrot.slane %v689, 1
        %v691 = vadd.f32 %v689, %v690
        %v692 = vadd.f32 %v332, %v348
        %v693 = vrot.slane %v692, 4
        %v694 = vadd.f32 %v692, %v693
        %v695 = vrot.slane %v694, 2
        %v696 = vadd.f32 %v694, %v695
        %v697 = vrot.slane %v696, 1
        %v698 = vadd.f32 %v696, %v697
        %v699 = vadd.f32 %v333, %v349
        %v700 = vrot.slane %v699, 4
        %v701 = vadd.f32 %v699, %v700
        %v702 = vrot.slane %v701, 2
        %v703 = vadd.f32 %v701, %v702
        %v704 = vrot.slane %v703, 1
        %v705 = vadd.f32 %v703, %v704
        %v706 = vadd.f32 %v334, %v350
        %v707 = vrot.slane %v706, 4
        %v708 = vadd.f32 %v706, %v707
        %v709 = vrot.slane %v708, 2
        %v710 = vadd.f32 %v708, %v709
        %v711 = vrot.slane %v710, 1
        %v712 = vadd.f32 %v710, %v711
        %v713 = vadd.f32 %v335, %v351
        %v714 = vrot.slane %v713, 4
        %v715 = vadd.f32 %v713, %v714
        %v716 = vrot.slane %v715, 2
        %v717 = vadd.f32 %v715, %v716
        %v718 = vrot.slane %v717, 1
        %v719 = vadd.f32 %v717, %v718
        %v720 = vadd.f32 %v336, %v352
        %v721 = vrot.slane %v720, 4
        %v722 = vadd.f32 %v720, %v721
        %v723 = vrot.slane %v722, 2
        %v724 = vadd.f32 %v722, %v723
        %v725 = vrot.slane %v724, 1
        %v726 = vadd.f32 %v724, %v725
        %v727 = vadd.f32 %v337, %v353
        %v728 = vrot.slane %v727, 4
        %v729 = vadd.f32 %v727, %v728
        %v730 = vrot.slane %v729, 2
        %v731 = vadd.f32 %v729, %v730
        %v732 = vrot.slane %v731, 1
        %v733 = vadd.f32 %v731, %v732
        %v734 = vadd.f32 %v338, %v354
        %v735 = vrot.slane %v734, 4
        %v736 = vadd.f32 %v734, %v735
        %v737 = vrot.slane %v736, 2
        %v738 = vadd.f32 %v736, %v737
        %v739 = vrot.slane %v738, 1
        %v740 = vadd.f32 %v738, %v739
        %v741 = vadd.f32 %v339, %v355
        %v742 = vrot.slane %v741, 4
        %v743 = vadd.f32 %v741, %v742
        %v744 = vrot.slane %v743, 2
        %v745 = vadd.f32 %v743, %v744
        %v746 = vrot.slane %v745, 1
        %v747 = vadd.f32 %v745, %v746
        %v748 = vadd.f32 %v340, %v356
        %v749 = vrot.slane %v748, 4
        %v750 = vadd.f32 %v748, %v749
        %v751 = vrot.slane %v750, 2
        %v752 = vadd.f32 %v750, %v751
        %v753 = vrot.slane %v752, 1
        %v754 = vadd.f32 %v752, %v753
        %v755 = vadd.f32 %v341, %v357
        %v756 = vrot.slane %v755, 4
        %v757 = vadd.f32 %v755, %v756
        %v758 = vrot.slane %v757, 2
        %v759 = vadd.f32 %v757, %v758
        %v760 = vrot.slane %v759, 1
        %v761 = vadd.f32 %v759, %v760
        %v762 = vadd.f32 %v342, %v358
        %v763 = vrot.slane %v762, 4
        %v764 = vadd.f32 %v762, %v763
        %v765 = vrot.slane %v764, 2
        %v766 = vadd.f32 %v764, %v765
        %v767 = vrot.slane %v766, 1
        %v768 = vadd.f32 %v766, %v767
        %v769 = vadd.f32 %v343, %v359
        %v770 = vrot.slane %v769, 4
        %v771 = vadd.f32 %v769, %v770
        %v772 = vrot.slane %v771, 2
        %v773 = vadd.f32 %v771, %v772
        %v774 = vrot.slane %v773, 1
        %v775 = vadd.f32 %v773, %v774
        %v776 = vadd.f32 %v360, %v376
        %v777 = vrot.slane %v776, 4
        %v778 = vadd.f32 %v776, %v777
        %v779 = vrot.slane %v778, 2
        %v780 = vadd.f32 %v778, %v779
        %v781 = vrot.slane %v780, 1
        %v782 = vadd.f32 %v780, %v781
        %v783 = vadd.f32 %v361, %v377
        %v784 = vrot.slane %v783, 4
        %v785 = vadd.f32 %v783, %v784
        %v786 = vrot.slane %v785, 2
        %v787 = vadd.f32 %v785, %v786
        %v788 = vrot.slane %v787, 1
        %v789 = vadd.f32 %v787, %v788
        %v790 = vadd.f32 %v362, %v378
        %v791 = vrot.slane %v790, 4
        %v792 = vadd.f32 %v790, %v791
        %v793 = vrot.slane %v792, 2
        %v794 = vadd.f32 %v792, %v793
        %v795 = vrot.slane %v794, 1
        %v796 = vadd.f32 %v794, %v795
        %v797 = vadd.f32 %v363, %v379
        %v798 = vrot.slane %v797, 4
        %v799 = vadd.f32 %v797, %v798
        %v800 = vrot.slane %v799, 2
        %v801 = vadd.f32 %v799, %v800
        %v802 = vrot.slane %v801, 1
        %v803 = vadd.f32 %v801, %v802
        %v804 = vadd.f32 %v364, %v380
        %v805 = vrot.slane %v804, 4
        %v806 = vadd.f32 %v804, %v805
        %v807 = vrot.slane %v806, 2
        %v808 = vadd.f32 %v806, %v807
        %v809 = vrot.slane %v808, 1
        %v810 = vadd.f32 %v808, %v809
        %v811 = vadd.f32 %v365, %v381
        %v812 = vrot.slane %v811, 4
        %v813 = vadd.f32 %v811, %v812
        %v814 = vrot.slane %v813, 2
        %v815 = vadd.f32 %v813, %v814
        %v816 = vrot.slane %v815, 1
        %v817 = vadd.f32 %v815, %v816
        %v818 = vadd.f32 %v366, %v382
        %v819 = vrot.slane %v818, 4
        %v820 = vadd.f32 %v818, %v819
        %v821 = vrot.slane %v820, 2
        %v822 = vadd.f32 %v820, %v821
        %v823 = vrot.slane %v822, 1
        %v824 = vadd.f32 %v822, %v823
        %v825 = vadd.f32 %v367, %v383
        %v826 = vrot.slane %v825, 4
        %v827 = vadd.f32 %v825, %v826
        %v828 = vrot.slane %v827, 2
        %v829 = vadd.f32 %v827, %v828
        %v830 = vrot.slane %v829, 1
        %v831 = vadd.f32 %v829, %v830
        %v832 = vadd.f32 %v368, %v384
        %v833 = vrot.slane %v832, 4
        %v834 = vadd.f32 %v832, %v833
        %v835 = vrot.slane %v834, 2
        %v836 = vadd.f32 %v834, %v835
        %v837 = vrot.slane %v836, 1
        %v838 = vadd.f32 %v836, %v837
        %v839 = vadd.f32 %v369, %v385
        %v840 = vrot.slane %v839, 4
        %v841 = vadd.f32 %v839, %v840
        %v842 = vrot.slane %v841, 2
        %v843 = vadd.f32 %v841, %v842
        %v844 = vrot.slane %v843, 1
        %v845 = vadd.f32 %v843, %v844
        %v846 = vadd.f32 %v370, %v386
        %v847 = vrot.slane %v846, 4
        %v848 = vadd.f32 %v846, %v847
        %v849 = vrot.slane %v848, 2
        %v850 = vadd.f32 %v848, %v849
        %v851 = vrot.slane %v850, 1
        %v852 = vadd.f32 %v850, %v851
        %v853 = vadd.f32 %v371, %v387
        %v854 = vrot.slane %v853, 4
        %v855 = vadd.f32 %v853, %v854
        %v856 = vrot.slane %v855, 2
        %v857 = vadd.f32 %v855, %v856
        %v858 = vrot.slane %v857, 1
        %v859 = vadd.f32 %v857, %v858
        %v860 = vadd.f32 %v372, %v388
        %v861 = vrot.slane %v860, 4
        %v862 = vadd.f32 %v860, %v861
        %v863 = vrot.slane %v862, 2
        %v864 = vadd.f32 %v862, %v863
        %v865 = vrot.slane %v864, 1
        %v866 = vadd.f32 %v864, %v865
        %v867 = vadd.f32 %v373, %v389
        %v868 = vrot.slane %v867, 4
        %v869 = vadd.f32 %v867, %v868
        %v870 = vrot.slane %v869, 2
        %v871 = vadd.f32 %v869, %v870
        %v872 = vrot.slane %v871, 1
        %v873 = vadd.f32 %v871, %v872
        %v874 = vadd.f32 %v374, %v390
        %v875 = vrot.slane %v874, 4
        %v876 = vadd.f32 %v874, %v875
        %v877 = vrot.slane %v876, 2
        %v878 = vadd.f32 %v876, %v877
        %v879 = vrot.slane %v878, 1
        %v880 = vadd.f32 %v878, %v879
        %v881 = vadd.f32 %v375, %v391
        %v882 = vrot.slane %v881, 4
        %v883 = vadd.f32 %v881, %v882
        %v884 = vrot.slane %v883, 2
        %v885 = vadd.f32 %v883, %v884
        %v886 = vrot.slane %v885, 1
        %v887 = vadd.f32 %v885, %v886
        %v888 = vadd.f32 %v392, %v408
        %v889 = vrot.slane %v888, 4
        %v890 = vadd.f32 %v888, %v889
        %v891 = vrot.slane %v890, 2
        %v892 = vadd.f32 %v890, %v891
        %v893 = vrot.slane %v892, 1
        %v894 = vadd.f32 %v892, %v893
        %v895 = vadd.f32 %v393, %v409
        %v896 = vrot.slane %v895, 4
        %v897 = vadd.f32 %v895, %v896
        %v898 = vrot.slane %v897, 2
        %v899 = vadd.f32 %v897, %v898
        %v900 = vrot.slane %v899, 1
        %v901 = vadd.f32 %v899, %v900
        %v902 = vadd.f32 %v394, %v410
        %v903 = vrot.slane %v902, 4
        %v904 = vadd.f32 %v902, %v903
        %v905 = vrot.slane %v904, 2
        %v906 = vadd.f32 %v904, %v905
        %v907 = vrot.slane %v906, 1
        %v908 = vadd.f32 %v906, %v907
        %v909 = vadd.f32 %v395, %v411
        %v910 = vrot.slane %v909, 4
        %v911 = vadd.f32 %v909, %v910
        %v912 = vrot.slane %v911, 2
        %v913 = vadd.f32 %v911, %v912
        %v914 = vrot.slane %v913, 1
        %v915 = vadd.f32 %v913, %v914
        %v916 = vadd.f32 %v396, %v412
        %v917 = vrot.slane %v916, 4
        %v918 = vadd.f32 %v916, %v917
        %v919 = vrot.slane %v918, 2
        %v920 = vadd.f32 %v918, %v919
        %v921 = vrot.slane %v920, 1
        %v922 = vadd.f32 %v920, %v921
        %v923 = vadd.f32 %v397, %v413
        %v924 = vrot.slane %v923, 4
        %v925 = vadd.f32 %v923, %v924
        %v926 = vrot.slane %v925, 2
        %v927 = vadd.f32 %v925, %v926
        %v928 = vrot.slane %v927, 1
        %v929 = vadd.f32 %v927, %v928
        %v930 = vadd.f32 %v398, %v414
        %v931 = vrot.slane %v930, 4
        %v932 = vadd.f32 %v930, %v931
        %v933 = vrot.slane %v932, 2
        %v934 = vadd.f32 %v932, %v933
        %v935 = vrot.slane %v934, 1
        %v936 = vadd.f32 %v934, %v935
        %v937 = vadd.f32 %v399, %v415
        %v938 = vrot.slane %v937, 4
        %v939 = vadd.f32 %v937, %v938
        %v940 = vrot.slane %v939, 2
        %v941 = vadd.f32 %v939, %v940
        %v942 = vrot.slane %v941, 1
        %v943 = vadd.f32 %v941, %v942
        %v944 = vadd.f32 %v400, %v416
        %v945 = vrot.slane %v944, 4
        %v946 = vadd.f32 %v944, %v945
        %v947 = vrot.slane %v946, 2
        %v948 = vadd.f32 %v946, %v947
        %v949 = vrot.slane %v948, 1
        %v950 = vadd.f32 %v948, %v949
        %v951 = vadd.f32 %v401, %v417
        %v952 = vrot.slane %v951, 4
        %v953 = vadd.f32 %v951, %v952
        %v954 = vrot.slane %v953, 2
        %v955 = vadd.f32 %v953, %v954
        %v956 = vrot.slane %v955, 1
        %v957 = vadd.f32 %v955, %v956
        %v958 = vadd.f32 %v402, %v418
        %v959 = vrot.slane %v958, 4
        %v960 = vadd.f32 %v958, %v959
        %v961 = vrot.slane %v960, 2
        %v962 = vadd.f32 %v960, %v961
        %v963 = vrot.slane %v962, 1
        %v964 = vadd.f32 %v962, %v963
        %v965 = vadd.f32 %v403, %v419
        %v966 = vrot.slane %v965, 4
        %v967 = vadd.f32 %v965, %v966
        %v968 = vrot.slane %v967, 2
        %v969 = vadd.f32 %v967, %v968
        %v970 = vrot.slane %v969, 1
        %v971 = vadd.f32 %v969, %v970
        %v972 = vadd.f32 %v404, %v420
        %v973 = vrot.slane %v972, 4
        %v974 = vadd.f32 %v972, %v973
        %v975 = vrot.slane %v974, 2
        %v976 = vadd.f32 %v974, %v975
        %v977 = vrot.slane %v976, 1
        %v978 = vadd.f32 %v976, %v977
        %v979 = vadd.f32 %v405, %v421
        %v980 = vrot.slane %v979, 4
        %v981 = vadd.f32 %v979, %v980
        %v982 = vrot.slane %v981, 2
        %v983 = vadd.f32 %v981, %v982
        %v984 = vrot.slane %v983, 1
        %v985 = vadd.f32 %v983, %v984
        %v986 = vadd.f32 %v406, %v422
        %v987 = vrot.slane %v986, 4
        %v988 = vadd.f32 %v986, %v987
        %v989 = vrot.slane %v988, 2
        %v990 = vadd.f32 %v988, %v989
        %v991 = vrot.slane %v990, 1
        %v992 = vadd.f32 %v990, %v991
        %v993 = vadd.f32 %v407, %v423
        %v994 = vrot.slane %v993, 4
        %v995 = vadd.f32 %v993, %v994
        %v996 = vrot.slane %v995, 2
        %v997 = vadd.f32 %v995, %v996
        %v998 = vrot.slane %v997, 1
        %v999 = vadd.f32 %v997, %v998
        %v1000 = vadd.f32 %v424, %v440
        %v1001 = vrot.slane %v1000, 4
        %v1002 = vadd.f32 %v1000, %v1001
        %v1003 = vrot.slane %v1002, 2
        %v1004 = vadd.f32 %v1002, %v1003
        %v1005 = vrot.slane %v1004, 1
        %v1006 = vadd.f32 %v1004, %v1005
        %v1007 = vadd.f32 %v425, %v441
        %v1008 = vrot.slane %v1007, 4
        %v1009 = vadd.f32 %v1007, %v1008
        %v1010 = vrot.slane %v1009, 2
        %v1011 = vadd.f32 %v1009, %v1010
        %v1012 = vrot.slane %v1011, 1
        %v1013 = vadd.f32 %v1011, %v1012
        %v1014 = vadd.f32 %v426, %v442
        %v1015 = vrot.slane %v1014, 4
        %v1016 = vadd.f32 %v1014, %v1015
        %v1017 = vrot.slane %v1016, 2
        %v1018 = vadd.f32 %v1016, %v1017
        %v1019 = vrot.slane %v1018, 1
        %v1020 = vadd.f32 %v1018, %v1019
        %v1021 = vadd.f32 %v427, %v443
        %v1022 = vrot.slane %v1021, 4
        %v1023 = vadd.f32 %v1021, %v1022
        %v1024 = vrot.slane %v1023, 2
        %v1025 = vadd.f32 %v1023, %v1024
        %v1026 = vrot.slane %v1025, 1
        %v1027 = vadd.f32 %v1025, %v1026
        %v1028 = vadd.f32 %v428, %v444
        %v1029 = vrot.slane %v1028, 4
        %v1030 = vadd.f32 %v1028, %v1029
        %v1031 = vrot.slane %v1030, 2
        %v1032 = vadd.f32 %v1030, %v1031
        %v1033 = vrot.slane %v1032, 1
        %v1034 = vadd.f32 %v1032, %v1033
        %v1035 = vadd.f32 %v429, %v445
        %v1036 = vrot.slane %v1035, 4
        %v1037 = vadd.f32 %v1035, %v1036
        %v1038 = vrot.slane %v1037, 2
        %v1039 = vadd.f32 %v1037, %v1038
        %v1040 = vrot.slane %v1039, 1
        %v1041 = vadd.f32 %v1039, %v1040
        %v1042 = vadd.f32 %v430, %v446
        %v1043 = vrot.slane %v1042, 4
        %v1044 = vadd.f32 %v1042, %v1043
        %v1045 = vrot.slane %v1044, 2
        %v1046 = vadd.f32 %v1044, %v1045
        %v1047 = vrot.slane %v1046, 1
        %v1048 = vadd.f32 %v1046, %v1047
        %v1049 = vadd.f32 %v431, %v447
        %v1050 = vrot.slane %v1049, 4
        %v1051 = vadd.f32 %v1049, %v1050
        %v1052 = vrot.slane %v1051, 2
        %v1053 = vadd.f32 %v1051, %v1052
        %v1054 = vrot.slane %v1053, 1
        %v1055 = vadd.f32 %v1053, %v1054
        %v1056 = vadd.f32 %v432, %v448
        %v1057 = vrot.slane %v1056, 4
        %v1058 = vadd.f32 %v1056, %v1057
        %v1059 = vrot.slane %v1058, 2
        %v1060 = vadd.f32 %v1058, %v1059
        %v1061 = vrot.slane %v1060, 1
        %v1062 = vadd.f32 %v1060, %v1061
        %v1063 = vadd.f32 %v433, %v449
        %v1064 = vrot.slane %v1063, 4
        %v1065 = vadd.f32 %v1063, %v1064
        %v1066 = vrot.slane %v1065, 2
        %v1067 = vadd.f32 %v1065, %v1066
        %v1068 = vrot.slane %v1067, 1
        %v1069 = vadd.f32 %v1067, %v1068
        %v1070 = vadd.f32 %v434, %v450
        %v1071 = vrot.slane %v1070, 4
        %v1072 = vadd.f32 %v1070, %v1071
        %v1073 = vrot.slane %v1072, 2
        %v1074 = vadd.f32 %v1072, %v1073
        %v1075 = vrot.slane %v1074, 1
        %v1076 = vadd.f32 %v1074, %v1075
        %v1077 = vadd.f32 %v435, %v451
        %v1078 = vrot.slane %v1077, 4
        %v1079 = vadd.f32 %v1077, %v1078
        %v1080 = vrot.slane %v1079, 2
        %v1081 = vadd.f32 %v1079, %v1080
        %v1082 = vrot.slane %v1081, 1
        %v1083 = vadd.f32 %v1081, %v1082
        %v1084 = vadd.f32 %v436, %v452
        %v1085 = vrot.slane %v1084, 4
        %v1086 = vadd.f32 %v1084, %v1085
        %v1087 = vrot.slane %v1086, 2
        %v1088 = vadd.f32 %v1086, %v1087
        %v1089 = vrot.slane %v1088, 1
        %v1090 = vadd.f32 %v1088, %v1089
        %v1091 = vadd.f32 %v437, %v453
        %v1092 = vrot.slane %v1091, 4
        %v1093 = vadd.f32 %v1091, %v1092
        %v1094 = vrot.slane %v1093, 2
        %v1095 = vadd.f32 %v1093, %v1094
        %v1096 = vrot.slane %v1095, 1
        %v1097 = vadd.f32 %v1095, %v1096
        %v1098 = vadd.f32 %v438, %v454
        %v1099 = vrot.slane %v1098, 4
        %v1100 = vadd.f32 %v1098, %v1099
        %v1101 = vrot.slane %v1100, 2
        %v1102 = vadd.f32 %v1100, %v1101
        %v1103 = vrot.slane %v1102, 1
        %v1104 = vadd.f32 %v1102, %v1103
        %v1105 = vadd.f32 %v439, %v455
        %v1106 = vrot.slane %v1105, 4
        %v1107 = vadd.f32 %v1105, %v1106
        %v1108 = vrot.slane %v1107, 2
        %v1109 = vadd.f32 %v1107, %v1108
        %v1110 = vrot.slane %v1109, 1
        %v1111 = vadd.f32 %v1109, %v1110
        %v1112 = vadd.f32 %v456, %v472
        %v1113 = vrot.slane %v1112, 4
        %v1114 = vadd.f32 %v1112, %v1113
        %v1115 = vrot.slane %v1114, 2
        %v1116 = vadd.f32 %v1114, %v1115
        %v1117 = vrot.slane %v1116, 1
        %v1118 = vadd.f32 %v1116, %v1117
        %v1119 = vadd.f32 %v457, %v473
        %v1120 = vrot.slane %v1119, 4
        %v1121 = vadd.f32 %v1119, %v1120
        %v1122 = vrot.slane %v1121, 2
        %v1123 = vadd.f32 %v1121, %v1122
        %v1124 = vrot.slane %v1123, 1
        %v1125 = vadd.f32 %v1123, %v1124
        %v1126 = vadd.f32 %v458, %v474
        %v1127 = vrot.slane %v1126, 4
        %v1128 = vadd.f32 %v1126, %v1127
        %v1129 = vrot.slane %v1128, 2
        %v1130 = vadd.f32 %v1128, %v1129
        %v1131 = vrot.slane %v1130, 1
        %v1132 = vadd.f32 %v1130, %v1131
        %v1133 = vadd.f32 %v459, %v475
        %v1134 = vrot.slane %v1133, 4
        %v1135 = vadd.f32 %v1133, %v1134
        %v1136 = vrot.slane %v1135, 2
        %v1137 = vadd.f32 %v1135, %v1136
        %v1138 = vrot.slane %v1137, 1
        %v1139 = vadd.f32 %v1137, %v1138
        %v1140 = vadd.f32 %v460, %v476
        %v1141 = vrot.slane %v1140, 4
        %v1142 = vadd.f32 %v1140, %v1141
        %v1143 = vrot.slane %v1142, 2
        %v1144 = vadd.f32 %v1142, %v1143
        %v1145 = vrot.slane %v1144, 1
        %v1146 = vadd.f32 %v1144, %v1145
        %v1147 = vadd.f32 %v461, %v477
        %v1148 = vrot.slane %v1147, 4
        %v1149 = vadd.f32 %v1147, %v1148
        %v1150 = vrot.slane %v1149, 2
        %v1151 = vadd.f32 %v1149, %v1150
        %v1152 = vrot.slane %v1151, 1
        %v1153 = vadd.f32 %v1151, %v1152
        %v1154 = vadd.f32 %v462, %v478
        %v1155 = vrot.slane %v1154, 4
        %v1156 = vadd.f32 %v1154, %v1155
        %v1157 = vrot.slane %v1156, 2
        %v1158 = vadd.f32 %v1156, %v1157
        %v1159 = vrot.slane %v1158, 1
        %v1160 = vadd.f32 %v1158, %v1159
        %v1161 = vadd.f32 %v463, %v479
        %v1162 = vrot.slane %v1161, 4
        %v1163 = vadd.f32 %v1161, %v1162
        %v1164 = vrot.slane %v1163, 2
        %v1165 = vadd.f32 %v1163, %v1164
        %v1166 = vrot.slane %v1165, 1
        %v1167 = vadd.f32 %v1165, %v1166
        %v1168 = vadd.f32 %v464, %v480
        %v1169 = vrot.slane %v1168, 4
        %v1170 = vadd.f32 %v1168, %v1169
        %v1171 = vrot.slane %v1170, 2
        %v1172 = vadd.f32 %v1170, %v1171
        %v1173 = vrot.slane %v1172, 1
        %v1174 = vadd.f32 %v1172, %v1173
        %v1175 = vadd.f32 %v465, %v481
        %v1176 = vrot.slane %v1175, 4
        %v1177 = vadd.f32 %v1175, %v1176
        %v1178 = vrot.slane %v1177, 2
        %v1179 = vadd.f32 %v1177, %v1178
        %v1180 = vrot.slane %v1179, 1
        %v1181 = vadd.f32 %v1179, %v1180
        %v1182 = vadd.f32 %v466, %v482
        %v1183 = vrot.slane %v1182, 4
        %v1184 = vadd.f32 %v1182, %v1183
        %v1185 = vrot.slane %v1184, 2
        %v1186 = vadd.f32 %v1184, %v1185
        %v1187 = vrot.slane %v1186, 1
        %v1188 = vadd.f32 %v1186, %v1187
        %v1189 = vadd.f32 %v467, %v483
        %v1190 = vrot.slane %v1189, 4
        %v1191 = vadd.f32 %v1189, %v1190
        %v1192 = vrot.slane %v1191, 2
        %v1193 = vadd.f32 %v1191, %v1192
        %v1194 = vrot.slane %v1193, 1
        %v1195 = vadd.f32 %v1193, %v1194
        %v1196 = vadd.f32 %v468, %v484
        %v1197 = vrot.slane %v1196, 4
        %v1198 = vadd.f32 %v1196, %v1197
        %v1199 = vrot.slane %v1198, 2
        %v1200 = vadd.f32 %v1198, %v1199
        %v1201 = vrot.slane %v1200, 1
        %v1202 = vadd.f32 %v1200, %v1201
        %v1203 = vadd.f32 %v469, %v485
        %v1204 = vrot.slane %v1203, 4
        %v1205 = vadd.f32 %v1203, %v1204
        %v1206 = vrot.slane %v1205, 2
        %v1207 = vadd.f32 %v1205, %v1206
        %v1208 = vrot.slane %v1207, 1
        %v1209 = vadd.f32 %v1207, %v1208
        %v1210 = vadd.f32 %v470, %v486
        %v1211 = vrot.slane %v1210, 4
        %v1212 = vadd.f32 %v1210, %v1211
        %v1213 = vrot.slane %v1212, 2
        %v1214 = vadd.f32 %v1212, %v1213
        %v1215 = vrot.slane %v1214, 1
        %v1216 = vadd.f32 %v1214, %v1215
        %v1217 = vadd.f32 %v471, %v487
        %v1218 = vrot.slane %v1217, 4
        %v1219 = vadd.f32 %v1217, %v1218
        %v1220 = vrot.slane %v1219, 2
        %v1221 = vadd.f32 %v1219, %v1220
        %v1222 = vrot.slane %v1221, 1
        %v1223 = vadd.f32 %v1221, %v1222
        %v1224 = vadd.f32 %v488, %v504
        %v1225 = vrot.slane %v1224, 4
        %v1226 = vadd.f32 %v1224, %v1225
        %v1227 = vrot.slane %v1226, 2
        %v1228 = vadd.f32 %v1226, %v1227
        %v1229 = vrot.slane %v1228, 1
        %v1230 = vadd.f32 %v1228, %v1229
        %v1231 = vadd.f32 %v489, %v505
        %v1232 = vrot.slane %v1231, 4
        %v1233 = vadd.f32 %v1231, %v1232
        %v1234 = vrot.slane %v1233, 2
        %v1235 = vadd.f32 %v1233, %v1234
        %v1236 = vrot.slane %v1235, 1
        %v1237 = vadd.f32 %v1235, %v1236
        %v1238 = vadd.f32 %v490, %v506
        %v1239 = vrot.slane %v1238, 4
        %v1240 = vadd.f32 %v1238, %v1239
        %v1241 = vrot.slane %v1240, 2
        %v1242 = vadd.f32 %v1240, %v1241
        %v1243 = vrot.slane %v1242, 1
        %v1244 = vadd.f32 %v1242, %v1243
        %v1245 = vadd.f32 %v491, %v507
        %v1246 = vrot.slane %v1245, 4
        %v1247 = vadd.f32 %v1245, %v1246
        %v1248 = vrot.slane %v1247, 2
        %v1249 = vadd.f32 %v1247, %v1248
        %v1250 = vrot.slane %v1249, 1
        %v1251 = vadd.f32 %v1249, %v1250
        %v1252 = vadd.f32 %v492, %v508
        %v1253 = vrot.slane %v1252, 4
        %v1254 = vadd.f32 %v1252, %v1253
        %v1255 = vrot.slane %v1254, 2
        %v1256 = vadd.f32 %v1254, %v1255
        %v1257 = vrot.slane %v1256, 1
        %v1258 = vadd.f32 %v1256, %v1257
        %v1259 = vadd.f32 %v493, %v509
        %v1260 = vrot.slane %v1259, 4
        %v1261 = vadd.f32 %v1259, %v1260
        %v1262 = vrot.slane %v1261, 2
        %v1263 = vadd.f32 %v1261, %v1262
        %v1264 = vrot.slane %v1263, 1
        %v1265 = vadd.f32 %v1263, %v1264
        %v1266 = vadd.f32 %v494, %v510
        %v1267 = vrot.slane %v1266, 4
        %v1268 = vadd.f32 %v1266, %v1267
        %v1269 = vrot.slane %v1268, 2
        %v1270 = vadd.f32 %v1268, %v1269
        %v1271 = vrot.slane %v1270, 1
        %v1272 = vadd.f32 %v1270, %v1271
        %v1273 = vadd.f32 %v495, %v511
        %v1274 = vrot.slane %v1273, 4
        %v1275 = vadd.f32 %v1273, %v1274
        %v1276 = vrot.slane %v1275, 2
        %v1277 = vadd.f32 %v1275, %v1276
        %v1278 = vrot.slane %v1277, 1
        %v1279 = vadd.f32 %v1277, %v1278
        %v1280 = vadd.f32 %v496, %v512
        %v1281 = vrot.slane %v1280, 4
        %v1282 = vadd.f32 %v1280, %v1281
        %v1283 = vrot.slane %v1282, 2
        %v1284 = vadd.f32 %v1282, %v1283
        %v1285 = vrot.slane %v1284, 1
        %v1286 = vadd.f32 %v1284, %v1285
        %v1287 = vadd.f32 %v497, %v513
        %v1288 = vrot.slane %v1287, 4
        %v1289 = vadd.f32 %v1287, %v1288
        %v1290 = vrot.slane %v1289, 2
        %v1291 = vadd.f32 %v1289, %v1290
        %v1292 = vrot.slane %v1291, 1
        %v1293 = vadd.f32 %v1291, %v1292
        %v1294 = vadd.f32 %v498, %v514
        %v1295 = vrot.slane %v1294, 4
        %v1296 = vadd.f32 %v1294, %v1295
        %v1297 = vrot.slane %v1296, 2
        %v1298 = vadd.f32 %v1296, %v1297
        %v1299 = vrot.slane %v1298, 1
        %v1300 = vadd.f32 %v1298, %v1299
        %v1301 = vadd.f32 %v499, %v515
        %v1302 = vrot.slane %v1301, 4
        %v1303 = vadd.f32 %v1301, %v1302
        %v1304 = vrot.slane %v1303, 2
        %v1305 = vadd.f32 %v1303, %v1304
        %v1306 = vrot.slane %v1305, 1
        %v1307 = vadd.f32 %v1305, %v1306
        %v1308 = vadd.f32 %v500, %v516
        %v1309 = vrot.slane %v1308, 4
        %v1310 = vadd.f32 %v1308, %v1309
        %v1311 = vrot.slane %v1310, 2
        %v1312 = vadd.f32 %v1310, %v1311
        %v1313 = vrot.slane %v1312, 1
        %v1314 = vadd.f32 %v1312, %v1313
        %v1315 = vadd.f32 %v501, %v517
        %v1316 = vrot.slane %v1315, 4
        %v1317 = vadd.f32 %v1315, %v1316
        %v1318 = vrot.slane %v1317, 2
        %v1319 = vadd.f32 %v1317, %v1318
        %v1320 = vrot.slane %v1319, 1
        %v1321 = vadd.f32 %v1319, %v1320
        %v1322 = vadd.f32 %v502, %v518
        %v1323 = vrot.slane %v1322, 4
        %v1324 = vadd.f32 %v1322, %v1323
        %v1325 = vrot.slane %v1324, 2
        %v1326 = vadd.f32 %v1324, %v1325
        %v1327 = vrot.slane %v1326, 1
        %v1328 = vadd.f32 %v1326, %v1327
        %v1329 = vadd.f32 %v503, %v519
        %v1330 = vrot.slane %v1329, 4
        %v1331 = vadd.f32 %v1329, %v1330
        %v1332 = vrot.slane %v1331, 2
        %v1333 = vadd.f32 %v1331, %v1332
        %v1334 = vrot.slane %v1333, 1
        %v1335 = vadd.f32 %v1333, %v1334
        %v1336 = vadd.f32 %v520, %v536
        %v1337 = vrot.slane %v1336, 4
        %v1338 = vadd.f32 %v1336, %v1337
        %v1339 = vrot.slane %v1338, 2
        %v1340 = vadd.f32 %v1338, %v1339
        %v1341 = vrot.slane %v1340, 1
        %v1342 = vadd.f32 %v1340, %v1341
        %v1343 = vadd.f32 %v521, %v537
        %v1344 = vrot.slane %v1343, 4
        %v1345 = vadd.f32 %v1343, %v1344
        %v1346 = vrot.slane %v1345, 2
        %v1347 = vadd.f32 %v1345, %v1346
        %v1348 = vrot.slane %v1347, 1
        %v1349 = vadd.f32 %v1347, %v1348
        %v1350 = vadd.f32 %v522, %v538
        %v1351 = vrot.slane %v1350, 4
        %v1352 = vadd.f32 %v1350, %v1351
        %v1353 = vrot.slane %v1352, 2
        %v1354 = vadd.f32 %v1352, %v1353
        %v1355 = vrot.slane %v1354, 1
        %v1356 = vadd.f32 %v1354, %v1355
        %v1357 = vadd.f32 %v523, %v539
        %v1358 = vrot.slane %v1357, 4
        %v1359 = vadd.f32 %v1357, %v1358
        %v1360 = vrot.slane %v1359, 2
        %v1361 = vadd.f32 %v1359, %v1360
        %v1362 = vrot.slane %v1361, 1
        %v1363 = vadd.f32 %v1361, %v1362
        %v1364 = vadd.f32 %v524, %v540
        %v1365 = vrot.slane %v1364, 4
        %v1366 = vadd.f32 %v1364, %v1365
        %v1367 = vrot.slane %v1366, 2
        %v1368 = vadd.f32 %v1366, %v1367
        %v1369 = vrot.slane %v1368, 1
        %v1370 = vadd.f32 %v1368, %v1369
        %v1371 = vadd.f32 %v525, %v541
        %v1372 = vrot.slane %v1371, 4
        %v1373 = vadd.f32 %v1371, %v1372
        %v1374 = vrot.slane %v1373, 2
        %v1375 = vadd.f32 %v1373, %v1374
        %v1376 = vrot.slane %v1375, 1
        %v1377 = vadd.f32 %v1375, %v1376
        %v1378 = vadd.f32 %v526, %v542
        %v1379 = vrot.slane %v1378, 4
        %v1380 = vadd.f32 %v1378, %v1379
        %v1381 = vrot.slane %v1380, 2
        %v1382 = vadd.f32 %v1380, %v1381
        %v1383 = vrot.slane %v1382, 1
        %v1384 = vadd.f32 %v1382, %v1383
        %v1385 = vadd.f32 %v527, %v543
        %v1386 = vrot.slane %v1385, 4
        %v1387 = vadd.f32 %v1385, %v1386
        %v1388 = vrot.slane %v1387, 2
        %v1389 = vadd.f32 %v1387, %v1388
        %v1390 = vrot.slane %v1389, 1
        %v1391 = vadd.f32 %v1389, %v1390
        %v1392 = vadd.f32 %v528, %v544
        %v1393 = vrot.slane %v1392, 4
        %v1394 = vadd.f32 %v1392, %v1393
        %v1395 = vrot.slane %v1394, 2
        %v1396 = vadd.f32 %v1394, %v1395
        %v1397 = vrot.slane %v1396, 1
        %v1398 = vadd.f32 %v1396, %v1397
        %v1399 = vadd.f32 %v529, %v545
        %v1400 = vrot.slane %v1399, 4
        %v1401 = vadd.f32 %v1399, %v1400
        %v1402 = vrot.slane %v1401, 2
        %v1403 = vadd.f32 %v1401, %v1402
        %v1404 = vrot.slane %v1403, 1
        %v1405 = vadd.f32 %v1403, %v1404
        %v1406 = vadd.f32 %v530, %v546
        %v1407 = vrot.slane %v1406, 4
        %v1408 = vadd.f32 %v1406, %v1407
        %v1409 = vrot.slane %v1408, 2
        %v1410 = vadd.f32 %v1408, %v1409
        %v1411 = vrot.slane %v1410, 1
        %v1412 = vadd.f32 %v1410, %v1411
        %v1413 = vadd.f32 %v531, %v547
        %v1414 = vrot.slane %v1413, 4
        %v1415 = vadd.f32 %v1413, %v1414
        %v1416 = vrot.slane %v1415, 2
        %v1417 = vadd.f32 %v1415, %v1416
        %v1418 = vrot.slane %v1417, 1
        %v1419 = vadd.f32 %v1417, %v1418
        %v1420 = vadd.f32 %v532, %v548
        %v1421 = vrot.slane %v1420, 4
        %v1422 = vadd.f32 %v1420, %v1421
        %v1423 = vrot.slane %v1422, 2
        %v1424 = vadd.f32 %v1422, %v1423
        %v1425 = vrot.slane %v1424, 1
        %v1426 = vadd.f32 %v1424, %v1425
        %v1427 = vadd.f32 %v533, %v549
        %v1428 = vrot.slane %v1427, 4
        %v1429 = vadd.f32 %v1427, %v1428
        %v1430 = vrot.slane %v1429, 2
        %v1431 = vadd.f32 %v1429, %v1430
        %v1432 = vrot.slane %v1431, 1
        %v1433 = vadd.f32 %v1431, %v1432
        %v1434 = vadd.f32 %v534, %v550
        %v1435 = vrot.slane %v1434, 4
        %v1436 = vadd.f32 %v1434, %v1435
        %v1437 = vrot.slane %v1436, 2
        %v1438 = vadd.f32 %v1436, %v1437
        %v1439 = vrot.slane %v1438, 1
        %v1440 = vadd.f32 %v1438, %v1439
        %v1441 = vadd.f32 %v535, %v551
        %v1442 = vrot.slane %v1441, 4
        %v1443 = vadd.f32 %v1441, %v1442
        %v1444 = vrot.slane %v1443, 2
        %v1445 = vadd.f32 %v1443, %v1444
        %v1446 = vrot.slane %v1445, 1
        %v1447 = vadd.f32 %v1445, %v1446
        %vm1576 = vcmask 1041409
        %v1577 = vsel %vm1576, %v670, %v558
        %vm1578 = vcmask 1042434
        %v1579 = vsel %vm1578, %v782, %v1577
        %vm1580 = vcmask 1043459
        %v1581 = vsel %vm1580, %v894, %v1579
        %vm1582 = vcmask 1044484
        %v1583 = vsel %vm1582, %v1006, %v1581
        %vm1584 = vcmask 1045509
        %v1585 = vsel %vm1584, %v1118, %v1583
        %vm1586 = vcmask 1046534
        %v1587 = vsel %vm1586, %v1230, %v1585
        %vm1588 = vcmask 1047559
        %v1589 = vsel %vm1588, %v1342, %v1587
        %v1590 = vsel %vm1576, %v677, %v565
        %v1591 = vsel %vm1578, %v789, %v1590
        %v1592 = vsel %vm1580, %v901, %v1591
        %v1593 = vsel %vm1582, %v1013, %v1592
        %v1594 = vsel %vm1584, %v1125, %v1593
        %v1595 = vsel %vm1586, %v1237, %v1594
        %v1596 = vsel %vm1588, %v1349, %v1595
        %v1597 = vsel %vm1576, %v684, %v572
        %v1598 = vsel %vm1578, %v796, %v1597
        %v1599 = vsel %vm1580, %v908, %v1598
        %v1600 = vsel %vm1582, %v1020, %v1599
        %v1601 = vsel %vm1584, %v1132, %v1600
        %v1602 = vsel %vm1586, %v1244, %v1601
        %v1603 = vsel %vm1588, %v1356, %v1602
        %v1604 = vsel %vm1576, %v691, %v579
        %v1605 = vsel %vm1578, %v803, %v1604
        %v1606 = vsel %vm1580, %v915, %v1605
        %v1607 = vsel %vm1582, %v1027, %v1606
        %v1608 = vsel %vm1584, %v1139, %v1607
        %v1609 = vsel %vm1586, %v1251, %v1608
        %v1610 = vsel %vm1588, %v1363, %v1609
        %v1611 = vsel %vm1576, %v698, %v586
        %v1612 = vsel %vm1578, %v810, %v1611
        %v1613 = vsel %vm1580, %v922, %v1612
        %v1614 = vsel %vm1582, %v1034, %v1613
        %v1615 = vsel %vm1584, %v1146, %v1614
        %v1616 = vsel %vm1586, %v1258, %v1615
        %v1617 = vsel %vm1588, %v1370, %v1616
        %v1618 = vsel %vm1576, %v705, %v593
        %v1619 = vsel %vm1578, %v817, %v1618
        %v1620 = vsel %vm1580, %v929, %v1619
        %v1621 = vsel %vm1582, %v1041, %v1620
        %v1622 = vsel %vm1584, %v1153, %v1621
        %v1623 = vsel %vm1586, %v1265, %v1622
        %v1624 = vsel %vm1588, %v1377, %v1623
        %v1625 = vsel %vm1576, %v712, %v600
        %v1626 = vsel %vm1578, %v824, %v1625
        %v1627 = vsel %vm1580, %v936, %v1626
        %v1628 = vsel %vm1582, %v1048, %v1627
        %v1629 = vsel %vm1584, %v1160, %v1628
        %v1630 = vsel %vm1586, %v1272, %v1629
        %v1631 = vsel %vm1588, %v1384, %v1630
        %v1632 = vsel %vm1576, %v719, %v607
        %v1633 = vsel %vm1578, %v831, %v1632
        %v1634 = vsel %vm1580, %v943, %v1633
        %v1635 = vsel %vm1582, %v1055, %v1634
        %v1636 = vsel %vm1584, %v1167, %v1635
        %v1637 = vsel %vm1586, %v1279, %v1636
        %v1638 = vsel %vm1588, %v1391, %v1637
        %v1639 = vsel %vm1576, %v726, %v614
        %v1640 = vsel %vm1578, %v838, %v1639
        %v1641 = vsel %vm1580, %v950, %v1640
        %v1642 = vsel %vm1582, %v1062, %v1641
        %v1643 = vsel %vm1584, %v1174, %v1642
        %v1644 = vsel %vm1586, %v1286, %v1643
        %v1645 = vsel %vm1588, %v1398, %v1644
        %v1646 = vsel %vm1576, %v733, %v621
        %v1647 = vsel %vm1578, %v845, %v1646
        %v1648 = vsel %vm1580, %v957, %v1647
        %v1649 = vsel %vm1582, %v1069, %v1648
        %v1650 = vsel %vm1584, %v1181, %v1649
        %v1651 = vsel %vm1586, %v1293, %v1650
        %v1652 = vsel %vm1588, %v1405, %v1651
        %v1653 = vsel %vm1576, %v740, %v628
        %v1654 = vsel %vm1578, %v852, %v1653
        %v1655 = vsel %vm1580, %v964, %v1654
        %v1656 = vsel %vm1582, %v1076, %v1655
        %v1657 = vsel %vm1584, %v1188, %v1656
        %v1658 = vsel %vm1586, %v1300, %v1657
        %v1659 = vsel %vm1588, %v1412, %v1658
        %v1660 = vsel %vm1576, %v747, %v635
        %v1661 = vsel %vm1578, %v859, %v1660
        %v1662 = vsel %vm1580, %v971, %v1661
        %v1663 = vsel %vm1582, %v1083, %v1662
        %v1664 = vsel %vm1584, %v1195, %v1663
        %v1665 = vsel %vm1586, %v1307, %v1664
        %v1666 = vsel %vm1588, %v1419, %v1665
        %v1667 = vsel %vm1576, %v754, %v642
        %v1668 = vsel %vm1578, %v866, %v1667
        %v1669 = vsel %vm1580, %v978, %v1668
        %v1670 = vsel %vm1582, %v1090, %v1669
        %v1671 = vsel %vm1584, %v1202, %v1670
        %v1672 = vsel %vm1586, %v1314, %v1671
        %v1673 = vsel %vm1588, %v1426, %v1672
        %v1674 = vsel %vm1576, %v761, %v649
        %v1675 = vsel %vm1578, %v873, %v1674
        %v1676 = vsel %vm1580, %v985, %v1675
        %v1677 = vsel %vm1582, %v1097, %v1676
        %v1678 = vsel %vm1584, %v1209, %v1677
        %v1679 = vsel %vm1586, %v1321, %v1678
        %v1680 = vsel %vm1588, %v1433, %v1679
        %v1681 = vsel %vm1576, %v768, %v656
        %v1682 = vsel %vm1578, %v880, %v1681
        %v1683 = vsel %vm1580, %v992, %v1682
        %v1684 = vsel %vm1582, %v1104, %v1683
        %v1685 = vsel %vm1584, %v1216, %v1684
        %v1686 = vsel %vm1586, %v1328, %v1685
        %v1687 = vsel %vm1588, %v1440, %v1686
        %v1688 = vsel %vm1576, %v775, %v663
        %v1689 = vsel %vm1578, %v887, %v1688
        %v1690 = vsel %vm1580, %v999, %v1689
        %v1691 = vsel %vm1582, %v1111, %v1690
        %v1692 = vsel %vm1584, %v1223, %v1691
        %v1693 = vsel %vm1586, %v1335, %v1692
        %v1694 = vsel %vm1588, %v1447, %v1693
        %v1711 = vadd.f32 %v280, %v1589
        %v1712 = vadd.f32 %v281, %v1596
        %v1713 = vadd.f32 %v282, %v1603
        %v1714 = vadd.f32 %v283, %v1610
        %v1715 = vadd.f32 %v284, %v1617
        %v1716 = vadd.f32 %v285, %v1624
        %v1717 = vadd.f32 %v286, %v1631
        %v1718 = vadd.f32 %v287, %v1638
        %v1719 = vadd.f32 %v288, %v1645
        %v1720 = vadd.f32 %v289, %v1652
        %v1721 = vadd.f32 %v290, %v1659
        %v1722 = vadd.f32 %v291, %v1666
        %v1723 = vadd.f32 %v292, %v1673
        %v1724 = vadd.f32 %v293, %v1680
        %v1725 = vadd.f32 %v294, %v1687
        %v1726 = vadd.f32 %v295, %v1694
        %1727 = vst [vmem:[#allocation2] sm:$0xff] %v1711
        %1728 = vst [vmem:[#allocation2 + $0x8] sm:$0xff] %v1712
        %1729 = vst [vmem:[#allocation2 + $0x10] sm:$0xff] %v1713
        %1730 = vst [vmem:[#allocation2 + $0x18] sm:$0xff] %v1714
        %1731 = vst [vmem:[#allocation2 + $0x20] sm:$0xff] %v1715
        %1732 = vst [vmem:[#allocation2 + $0x28] sm:$0xff] %v1716
        %1733 = vst [vmem:[#allocation2 + $0x30] sm:$0xff] %v1717
        %1734 = vst [vmem:[#allocation2 + $0x38] sm:$0xff] %v1718
        %1735 = vst [vmem:[#allocation2 + $0x40] sm:$0xff] %v1719
        %1736 = vst [vmem:[#allocation2 + $0x48] sm:$0xff] %v1720
        %1737 = vst [vmem:[#allocation2 + $0x50] sm:$0xff] %v1721
        %1738 = vst [vmem:[#allocation2 + $0x58] sm:$0xff] %v1722
        %1739 = vst [vmem:[#allocation2 + $0x60] sm:$0xff] %v1723
        %1740 = vst [vmem:[#allocation2 + $0x68] sm:$0xff] %v1724
        %1741 = vst [vmem:[#allocation2 + $0x70] sm:$0xff] %v1725
        %1742 = vst [vmem:[#allocation2 + $0x78] sm:$0xff] %v1726
        // Predicated region
        $region45: #{tpu_custom_call.1} parent=31 // pred_check
          %p1743 = pneg %p260
        $region46: #{tpu_custom_call.1} parent=31 // pred_check_branch
          %1745 = sbr.rel (%p1743) target = $region48
        $region47: #{tpu_custom_call.1} parent=31 // pred_region
          %v1746 = vld [vmem:[#allocation2] sm:$0xff]
          %v1747 = vld [vmem:[#allocation2 + $0x8] sm:$0xff]
          %v1748 = vld [vmem:[#allocation2 + $0x10] sm:$0xff]
          %v1749 = vld [vmem:[#allocation2 + $0x18] sm:$0xff]
          %v1750 = vld [vmem:[#allocation2 + $0x20] sm:$0xff]
          %v1751 = vld [vmem:[#allocation2 + $0x28] sm:$0xff]
          %v1752 = vld [vmem:[#allocation2 + $0x30] sm:$0xff]
          %v1753 = vld [vmem:[#allocation2 + $0x38] sm:$0xff]
          %v1754 = vld [vmem:[#allocation2 + $0x40] sm:$0xff]
          %v1755 = vld [vmem:[#allocation2 + $0x48] sm:$0xff]
          %v1756 = vld [vmem:[#allocation2 + $0x50] sm:$0xff]
          %v1757 = vld [vmem:[#allocation2 + $0x58] sm:$0xff]
          %v1758 = vld [vmem:[#allocation2 + $0x60] sm:$0xff]
          %v1759 = vld [vmem:[#allocation2 + $0x68] sm:$0xff]
          %v1760 = vld [vmem:[#allocation2 + $0x70] sm:$0xff]
          %v1761 = vld [vmem:[#allocation2 + $0x78] sm:$0xff]
          %v1762 = vmul.f32 %v1746, 0.0625
          %v1763 = vmul.f32 %v1747, 0.0625
          %v1764 = vmul.f32 %v1748, 0.0625
          %v1765 = vmul.f32 %v1749, 0.0625
          %v1766 = vmul.f32 %v1750, 0.0625
          %v1767 = vmul.f32 %v1751, 0.0625
          %v1768 = vmul.f32 %v1752, 0.0625
          %v1769 = vmul.f32 %v1753, 0.0625
          %v1770 = vmul.f32 %v1754, 0.0625
          %v1771 = vmul.f32 %v1755, 0.0625
          %v1772 = vmul.f32 %v1756, 0.0625
          %v1773 = vmul.f32 %v1757, 0.0625
          %v1774 = vmul.f32 %v1758, 0.0625
          %v1775 = vmul.f32 %v1759, 0.0625
          %v1776 = vmul.f32 %v1760, 0.0625
          %v1777 = vmul.f32 %v1761, 0.0625
          %1778 = vst [vmem:[%s257] sm:$0xff] %v1762
          %1779 = vst [vmem:[%s257 + $0x8] sm:$0xff] %v1763
          %1780 = vst [vmem:[%s257 + $0x10] sm:$0xff] %v1764
          %1781 = vst [vmem:[%s257 + $0x18] sm:$0xff] %v1765
          %1782 = vst [vmem:[%s257 + $0x20] sm:$0xff] %v1766
          %1783 = vst [vmem:[%s257 + $0x28] sm:$0xff] %v1767
          %1784 = vst [vmem:[%s257 + $0x30] sm:$0xff] %v1768
          %1785 = vst [vmem:[%s257 + $0x38] sm:$0xff] %v1769
          %1786 = vst [vmem:[%s257 + $0x40] sm:$0xff] %v1770
          %1787 = vst [vmem:[%s257 + $0x48] sm:$0xff] %v1771
          %1788 = vst [vmem:[%s257 + $0x50] sm:$0xff] %v1772
          %1789 = vst [vmem:[%s257 + $0x58] sm:$0xff] %v1773
          %1790 = vst [vmem:[%s257 + $0x60] sm:$0xff] %v1774
          %1791 = vst [vmem:[%s257 + $0x68] sm:$0xff] %v1775
          %1792 = vst [vmem:[%s257 + $0x70] sm:$0xff] %v1776
          %1793 = vst [vmem:[%s257 + $0x78] sm:$0xff] %v1777
          %v1794 = vld [vmem:[%s1] sm:$0xff]
          %v1795 = vld [vmem:[%s1 + $0x8] sm:$0xff]
          %v1796 = vld [vmem:[%s1 + $0x10] sm:$0xff]
          %v1797 = vld [vmem:[%s1 + $0x18] sm:$0xff]
          %v1798 = vld [vmem:[%s1 + $0x20] sm:$0xff]
          %v1799 = vld [vmem:[%s1 + $0x28] sm:$0xff]
          %v1800 = vld [vmem:[%s1 + $0x30] sm:$0xff]
          %v1801 = vld [vmem:[%s1 + $0x38] sm:$0xff]
          %v1802 = vld [vmem:[%s1 + $0x40] sm:$0xff]
          %v1803 = vld [vmem:[%s1 + $0x48] sm:$0xff]
          %v1804 = vld [vmem:[%s1 + $0x50] sm:$0xff]
          %v1805 = vld [vmem:[%s1 + $0x58] sm:$0xff]
          %v1806 = vld [vmem:[%s1 + $0x60] sm:$0xff]
          %v1807 = vld [vmem:[%s1 + $0x68] sm:$0xff]
          %v1808 = vld [vmem:[%s1 + $0x70] sm:$0xff]
          %v1809 = vld [vmem:[%s1 + $0x78] sm:$0xff]
          %v1810 = vld [vmem:[%s1 + $0x80] sm:$0xff]
          %v1811 = vld [vmem:[%s1 + $0x88] sm:$0xff]
          %v1812 = vld [vmem:[%s1 + $0x90] sm:$0xff]
          %v1813 = vld [vmem:[%s1 + $0x98] sm:$0xff]
          %v1814 = vld [vmem:[%s1 + $0xa0] sm:$0xff]
          %v1815 = vld [vmem:[%s1 + $0xa8] sm:$0xff]
          %v1816 = vld [vmem:[%s1 + $0xb0] sm:$0xff]
          %v1817 = vld [vmem:[%s1 + $0xb8] sm:$0xff]
          %v1818 = vld [vmem:[%s1 + $0xc0] sm:$0xff]
          %v1819 = vld [vmem:[%s1 + $0xc8] sm:$0xff]
          %v1820 = vld [vmem:[%s1 + $0xd0] sm:$0xff]
          %v1821 = vld [vmem:[%s1 + $0xd8] sm:$0xff]
          %v1822 = vld [vmem:[%s1 + $0xe0] sm:$0xff]
          %v1823 = vld [vmem:[%s1 + $0xe8] sm:$0xff]
          %v1824 = vld [vmem:[%s1 + $0xf0] sm:$0xff]
          %v1825 = vld [vmem:[%s1 + $0xf8] sm:$0xff]
          %v1826 = vld [vmem:[%s1 + $0x100] sm:$0xff]
          %v1827 = vld [vmem:[%s1 + $0x108] sm:$0xff]
          %v1828 = vld [vmem:[%s1 + $0x110] sm:$0xff]
          %v1829 = vld [vmem:[%s1 + $0x118] sm:$0xff]
          %v1830 = vld [vmem:[%s1 + $0x120] sm:$0xff]
          %v1831 = vld [vmem:[%s1 + $0x128] sm:$0xff]
          %v1832 = vld [vmem:[%s1 + $0x130] sm:$0xff]
          %v1833 = vld [vmem:[%s1 + $0x138] sm:$0xff]
          %v1834 = vld [vmem:[%s1 + $0x140] sm:$0xff]
          %v1835 = vld [vmem:[%s1 + $0x148] sm:$0xff]
          %v1836 = vld [vmem:[%s1 + $0x150] sm:$0xff]
          %v1837 = vld [vmem:[%s1 + $0x158] sm:$0xff]
          %v1838 = vld [vmem:[%s1 + $0x160] sm:$0xff]
          %v1839 = vld [vmem:[%s1 + $0x168] sm:$0xff]
          %v1840 = vld [vmem:[%s1 + $0x170] sm:$0xff]
          %v1841 = vld [vmem:[%s1 + $0x178] sm:$0xff]
          %v1842 = vld [vmem:[%s1 + $0x180] sm:$0xff]
          %v1843 = vld [vmem:[%s1 + $0x188] sm:$0xff]
          %v1844 = vld [vmem:[%s1 + $0x190] sm:$0xff]
          %v1845 = vld [vmem:[%s1 + $0x198] sm:$0xff]
          %v1846 = vld [vmem:[%s1 + $0x1a0] sm:$0xff]
          %v1847 = vld [vmem:[%s1 + $0x1a8] sm:$0xff]
          %v1848 = vld [vmem:[%s1 + $0x1b0] sm:$0xff]
          %v1849 = vld [vmem:[%s1 + $0x1b8] sm:$0xff]
          %v1850 = vld [vmem:[%s1 + $0x1c0] sm:$0xff]
          %v1851 = vld [vmem:[%s1 + $0x1c8] sm:$0xff]
          %v1852 = vld [vmem:[%s1 + $0x1d0] sm:$0xff]
          %v1853 = vld [vmem:[%s1 + $0x1d8] sm:$0xff]
          %v1854 = vld [vmem:[%s1 + $0x1e0] sm:$0xff]
          %v1855 = vld [vmem:[%s1 + $0x1e8] sm:$0xff]
          %v1856 = vld [vmem:[%s1 + $0x1f0] sm:$0xff]
          %v1857 = vld [vmem:[%s1 + $0x1f8] sm:$0xff]
          %v1858 = vld [vmem:[%s1 + $0x200] sm:$0xff]
          %v1859 = vld [vmem:[%s1 + $0x208] sm:$0xff]
          %v1860 = vld [vmem:[%s1 + $0x210] sm:$0xff]
          %v1861 = vld [vmem:[%s1 + $0x218] sm:$0xff]
          %v1862 = vld [vmem:[%s1 + $0x220] sm:$0xff]
          %v1863 = vld [vmem:[%s1 + $0x228] sm:$0xff]
          %v1864 = vld [vmem:[%s1 + $0x230] sm:$0xff]
          %v1865 = vld [vmem:[%s1 + $0x238] sm:$0xff]
          %v1866 = vld [vmem:[%s1 + $0x240] sm:$0xff]
          %v1867 = vld [vmem:[%s1 + $0x248] sm:$0xff]
          %v1868 = vld [vmem:[%s1 + $0x250] sm:$0xff]
          %v1869 = vld [vmem:[%s1 + $0x258] sm:$0xff]
          %v1870 = vld [vmem:[%s1 + $0x260] sm:$0xff]
          %v1871 = vld [vmem:[%s1 + $0x268] sm:$0xff]
          %v1872 = vld [vmem:[%s1 + $0x270] sm:$0xff]
          %v1873 = vld [vmem:[%s1 + $0x278] sm:$0xff]
          %v1874 = vld [vmem:[%s1 + $0x280] sm:$0xff]
          %v1875 = vld [vmem:[%s1 + $0x288] sm:$0xff]
          %v1876 = vld [vmem:[%s1 + $0x290] sm:$0xff]
          %v1877 = vld [vmem:[%s1 + $0x298] sm:$0xff]
          %v1878 = vld [vmem:[%s1 + $0x2a0] sm:$0xff]
          %v1879 = vld [vmem:[%s1 + $0x2a8] sm:$0xff]
          %v1880 = vld [vmem:[%s1 + $0x2b0] sm:$0xff]
          %v1881 = vld [vmem:[%s1 + $0x2b8] sm:$0xff]
          %v1882 = vld [vmem:[%s1 + $0x2c0] sm:$0xff]
          %v1883 = vld [vmem:[%s1 + $0x2c8] sm:$0xff]
          %v1884 = vld [vmem:[%s1 + $0x2d0] sm:$0xff]
          %v1885 = vld [vmem:[%s1 + $0x2d8] sm:$0xff]
          %v1886 = vld [vmem:[%s1 + $0x2e0] sm:$0xff]
          %v1887 = vld [vmem:[%s1 + $0x2e8] sm:$0xff]
          %v1888 = vld [vmem:[%s1 + $0x2f0] sm:$0xff]
          %v1889 = vld [vmem:[%s1 + $0x2f8] sm:$0xff]
          %v1890 = vld [vmem:[%s1 + $0x300] sm:$0xff]
          %v1891 = vld [vmem:[%s1 + $0x308] sm:$0xff]
          %v1892 = vld [vmem:[%s1 + $0x310] sm:$0xff]
          %v1893 = vld [vmem:[%s1 + $0x318] sm:$0xff]
          %v1894 = vld [vmem:[%s1 + $0x320] sm:$0xff]
          %v1895 = vld [vmem:[%s1 + $0x328] sm:$0xff]
          %v1896 = vld [vmem:[%s1 + $0x330] sm:$0xff]
          %v1897 = vld [vmem:[%s1 + $0x338] sm:$0xff]
          %v1898 = vld [vmem:[%s1 + $0x340] sm:$0xff]
          %v1899 = vld [vmem:[%s1 + $0x348] sm:$0xff]
          %v1900 = vld [vmem:[%s1 + $0x350] sm:$0xff]
          %v1901 = vld [vmem:[%s1 + $0x358] sm:$0xff]
          %v1902 = vld [vmem:[%s1 + $0x360] sm:$0xff]
          %v1903 = vld [vmem:[%s1 + $0x368] sm:$0xff]
          %v1904 = vld [vmem:[%s1 + $0x370] sm:$0xff]
          %v1905 = vld [vmem:[%s1 + $0x378] sm:$0xff]
          %v1906 = vld [vmem:[%s1 + $0x380] sm:$0xff]
          %v1907 = vld [vmem:[%s1 + $0x388] sm:$0xff]
          %v1908 = vld [vmem:[%s1 + $0x390] sm:$0xff]
          %v1909 = vld [vmem:[%s1 + $0x398] sm:$0xff]
          %v1910 = vld [vmem:[%s1 + $0x3a0] sm:$0xff]
          %v1911 = vld [vmem:[%s1 + $0x3a8] sm:$0xff]
          %v1912 = vld [vmem:[%s1 + $0x3b0] sm:$0xff]
          %v1913 = vld [vmem:[%s1 + $0x3b8] sm:$0xff]
          %v1914 = vld [vmem:[%s1 + $0x3c0] sm:$0xff]
          %v1915 = vld [vmem:[%s1 + $0x3c8] sm:$0xff]
          %v1916 = vld [vmem:[%s1 + $0x3d0] sm:$0xff]
          %v1917 = vld [vmem:[%s1 + $0x3d8] sm:$0xff]
          %v1918 = vld [vmem:[%s1 + $0x3e0] sm:$0xff]
          %v1919 = vld [vmem:[%s1 + $0x3e8] sm:$0xff]
          %v1920 = vld [vmem:[%s1 + $0x3f0] sm:$0xff]
          %v1921 = vld [vmem:[%s1 + $0x3f8] sm:$0xff]
          %v1922 = vld [vmem:[%s1 + $0x400] sm:$0xff]
          %v1923 = vld [vmem:[%s1 + $0x408] sm:$0xff]
          %v1924 = vld [vmem:[%s1 + $0x410] sm:$0xff]
          %v1925 = vld [vmem:[%s1 + $0x418] sm:$0xff]
          %v1926 = vld [vmem:[%s1 + $0x420] sm:$0xff]
          %v1927 = vld [vmem:[%s1 + $0x428] sm:$0xff]
          %v1928 = vld [vmem:[%s1 + $0x430] sm:$0xff]
          %v1929 = vld [vmem:[%s1 + $0x438] sm:$0xff]
          %v1930 = vld [vmem:[%s1 + $0x440] sm:$0xff]
          %v1931 = vld [vmem:[%s1 + $0x448] sm:$0xff]
          %v1932 = vld [vmem:[%s1 + $0x450] sm:$0xff]
          %v1933 = vld [vmem:[%s1 + $0x458] sm:$0xff]
          %v1934 = vld [vmem:[%s1 + $0x460] sm:$0xff]
          %v1935 = vld [vmem:[%s1 + $0x468] sm:$0xff]
          %v1936 = vld [vmem:[%s1 + $0x470] sm:$0xff]
          %v1937 = vld [vmem:[%s1 + $0x478] sm:$0xff]
          %v1938 = vld [vmem:[%s1 + $0x480] sm:$0xff]
          %v1939 = vld [vmem:[%s1 + $0x488] sm:$0xff]
          %v1940 = vld [vmem:[%s1 + $0x490] sm:$0xff]
          %v1941 = vld [vmem:[%s1 + $0x498] sm:$0xff]
          %v1942 = vld [vmem:[%s1 + $0x4a0] sm:$0xff]
          %v1943 = vld [vmem:[%s1 + $0x4a8] sm:$0xff]
          %v1944 = vld [vmem:[%s1 + $0x4b0] sm:$0xff]
          %v1945 = vld [vmem:[%s1 + $0x4b8] sm:$0xff]
          %v1946 = vld [vmem:[%s1 + $0x4c0] sm:$0xff]
          %v1947 = vld [vmem:[%s1 + $0x4c8] sm:$0xff]
          %v1948 = vld [vmem:[%s1 + $0x4d0] sm:$0xff]
          %v1949 = vld [vmem:[%s1 + $0x4d8] sm:$0xff]
          %v1950 = vld [vmem:[%s1 + $0x4e0] sm:$0xff]
          %v1951 = vld [vmem:[%s1 + $0x4e8] sm:$0xff]
          %v1952 = vld [vmem:[%s1 + $0x4f0] sm:$0xff]
          %v1953 = vld [vmem:[%s1 + $0x4f8] sm:$0xff]
          %v1954 = vld [vmem:[%s1 + $0x500] sm:$0xff]
          %v1955 = vld [vmem:[%s1 + $0x508] sm:$0xff]
          %v1956 = vld [vmem:[%s1 + $0x510] sm:$0xff]
          %v1957 = vld [vmem:[%s1 + $0x518] sm:$0xff]
          %v1958 = vld [vmem:[%s1 + $0x520] sm:$0xff]
          %v1959 = vld [vmem:[%s1 + $0x528] sm:$0xff]
          %v1960 = vld [vmem:[%s1 + $0x530] sm:$0xff]
          %v1961 = vld [vmem:[%s1 + $0x538] sm:$0xff]
          %v1962 = vld [vmem:[%s1 + $0x540] sm:$0xff]
          %v1963 = vld [vmem:[%s1 + $0x548] sm:$0xff]
          %v1964 = vld [vmem:[%s1 + $0x550] sm:$0xff]
          %v1965 = vld [vmem:[%s1 + $0x558] sm:$0xff]
          %v1966 = vld [vmem:[%s1 + $0x560] sm:$0xff]
          %v1967 = vld [vmem:[%s1 + $0x568] sm:$0xff]
          %v1968 = vld [vmem:[%s1 + $0x570] sm:$0xff]
          %v1969 = vld [vmem:[%s1 + $0x578] sm:$0xff]
          %v1970 = vld [vmem:[%s1 + $0x580] sm:$0xff]
          %v1971 = vld [vmem:[%s1 + $0x588] sm:$0xff]
          %v1972 = vld [vmem:[%s1 + $0x590] sm:$0xff]
          %v1973 = vld [vmem:[%s1 + $0x598] sm:$0xff]
          %v1974 = vld [vmem:[%s1 + $0x5a0] sm:$0xff]
          %v1975 = vld [vmem:[%s1 + $0x5a8] sm:$0xff]
          %v1976 = vld [vmem:[%s1 + $0x5b0] sm:$0xff]
          %v1977 = vld [vmem:[%s1 + $0x5b8] sm:$0xff]
          %v1978 = vld [vmem:[%s1 + $0x5c0] sm:$0xff]
          %v1979 = vld [vmem:[%s1 + $0x5c8] sm:$0xff]
          %v1980 = vld [vmem:[%s1 + $0x5d0] sm:$0xff]
          %v1981 = vld [vmem:[%s1 + $0x5d8] sm:$0xff]
          %v1982 = vld [vmem:[%s1 + $0x5e0] sm:$0xff]
          %v1983 = vld [vmem:[%s1 + $0x5e8] sm:$0xff]
          %v1984 = vld [vmem:[%s1 + $0x5f0] sm:$0xff]
          %v1985 = vld [vmem:[%s1 + $0x5f8] sm:$0xff]
          %v1986 = vld [vmem:[%s1 + $0x600] sm:$0xff]
          %v1987 = vld [vmem:[%s1 + $0x608] sm:$0xff]
          %v1988 = vld [vmem:[%s1 + $0x610] sm:$0xff]
          %v1989 = vld [vmem:[%s1 + $0x618] sm:$0xff]
          %v1990 = vld [vmem:[%s1 + $0x620] sm:$0xff]
          %v1991 = vld [vmem:[%s1 + $0x628] sm:$0xff]
          %v1992 = vld [vmem:[%s1 + $0x630] sm:$0xff]
          %v1993 = vld [vmem:[%s1 + $0x638] sm:$0xff]
          %v1994 = vld [vmem:[%s1 + $0x640] sm:$0xff]
          %v1995 = vld [vmem:[%s1 + $0x648] sm:$0xff]
          %v1996 = vld [vmem:[%s1 + $0x650] sm:$0xff]
          %v1997 = vld [vmem:[%s1 + $0x658] sm:$0xff]
          %v1998 = vld [vmem:[%s1 + $0x660] sm:$0xff]
          %v1999 = vld [vmem:[%s1 + $0x668] sm:$0xff]
          %v2000 = vld [vmem:[%s1 + $0x670] sm:$0xff]
          %v2001 = vld [vmem:[%s1 + $0x678] sm:$0xff]
          %v2002 = vld [vmem:[%s1 + $0x680] sm:$0xff]
          %v2003 = vld [vmem:[%s1 + $0x688] sm:$0xff]
          %v2004 = vld [vmem:[%s1 + $0x690] sm:$0xff]
          %v2005 = vld [vmem:[%s1 + $0x698] sm:$0xff]
          %v2006 = vld [vmem:[%s1 + $0x6a0] sm:$0xff]
          %v2007 = vld [vmem:[%s1 + $0x6a8] sm:$0xff]
          %v2008 = vld [vmem:[%s1 + $0x6b0] sm:$0xff]
          %v2009 = vld [vmem:[%s1 + $0x6b8] sm:$0xff]
          %v2010 = vld [vmem:[%s1 + $0x6c0] sm:$0xff]
          %v2011 = vld [vmem:[%s1 + $0x6c8] sm:$0xff]
          %v2012 = vld [vmem:[%s1 + $0x6d0] sm:$0xff]
          %v2013 = vld [vmem:[%s1 + $0x6d8] sm:$0xff]
          %v2014 = vld [vmem:[%s1 + $0x6e0] sm:$0xff]
          %v2015 = vld [vmem:[%s1 + $0x6e8] sm:$0xff]
          %v2016 = vld [vmem:[%s1 + $0x6f0] sm:$0xff]
          %v2017 = vld [vmem:[%s1 + $0x6f8] sm:$0xff]
          %v2018 = vld [vmem:[%s1 + $0x700] sm:$0xff]
          %v2019 = vld [vmem:[%s1 + $0x708] sm:$0xff]
          %v2020 = vld [vmem:[%s1 + $0x710] sm:$0xff]
          %v2021 = vld [vmem:[%s1 + $0x718] sm:$0xff]
          %v2022 = vld [vmem:[%s1 + $0x720] sm:$0xff]
          %v2023 = vld [vmem:[%s1 + $0x728] sm:$0xff]
          %v2024 = vld [vmem:[%s1 + $0x730] sm:$0xff]
          %v2025 = vld [vmem:[%s1 + $0x738] sm:$0xff]
          %v2026 = vld [vmem:[%s1 + $0x740] sm:$0xff]
          %v2027 = vld [vmem:[%s1 + $0x748] sm:$0xff]
          %v2028 = vld [vmem:[%s1 + $0x750] sm:$0xff]
          %v2029 = vld [vmem:[%s1 + $0x758] sm:$0xff]
          %v2030 = vld [vmem:[%s1 + $0x760] sm:$0xff]
          %v2031 = vld [vmem:[%s1 + $0x768] sm:$0xff]
          %v2032 = vld [vmem:[%s1 + $0x770] sm:$0xff]
          %v2033 = vld [vmem:[%s1 + $0x778] sm:$0xff]
          %v2034 = vld [vmem:[%s1 + $0x780] sm:$0xff]
          %v2035 = vld [vmem:[%s1 + $0x788] sm:$0xff]
          %v2036 = vld [vmem:[%s1 + $0x790] sm:$0xff]
          %v2037 = vld [vmem:[%s1 + $0x798] sm:$0xff]
          %v2038 = vld [vmem:[%s1 + $0x7a0] sm:$0xff]
          %v2039 = vld [vmem:[%s1 + $0x7a8] sm:$0xff]
          %v2040 = vld [vmem:[%s1 + $0x7b0] sm:$0xff]
          %v2041 = vld [vmem:[%s1 + $0x7b8] sm:$0xff]
          %v2042 = vld [vmem:[%s1 + $0x7c0] sm:$0xff]
          %v2043 = vld [vmem:[%s1 + $0x7c8] sm:$0xff]
          %v2044 = vld [vmem:[%s1 + $0x7d0] sm:$0xff]
          %v2045 = vld [vmem:[%s1 + $0x7d8] sm:$0xff]
          %v2046 = vld [vmem:[%s1 + $0x7e0] sm:$0xff]
          %v2047 = vld [vmem:[%s1 + $0x7e8] sm:$0xff]
          %v2048 = vld [vmem:[%s1 + $0x7f0] sm:$0xff]
          %v2049 = vld [vmem:[%s1 + $0x7f8] sm:$0xff]
          %v2050 = vld [vmem:[#allocation6] sm:$0x1]
          %v2052 = vlaneseq
          %v2053 = vshrl.u32 %v2052, 7
          %v2054 = vsub.s32 0, %v2053
          %v2055 = vrot.slane %v2050, %v2054
          %2057 = vmatprep.subr.mxu0 0.0
          %2058 = vmatpush1.msra.mxu0 %v1794
          %2059 = vmatprep.subr.mxu0 0.0
          %2060 = vmatpush1.msra.mxu0 %v1795
          %2061 = vmatprep.subr.mxu0 0.0
          %2062 = vmatpush1.msra.mxu0 %v1796
          %2063 = vmatprep.subr.mxu0 0.0
          %2064 = vmatpush1.msra.mxu0 %v1797
          %2065 = vmatprep.subr.mxu0 0.0
          %2066 = vmatpush1.msra.mxu0 %v1798
          %2067 = vmatprep.subr.mxu0 0.0
          %2068 = vmatpush1.msra.mxu0 %v1799
          %2069 = vmatprep.subr.mxu0 0.0
          %2070 = vmatpush1.msra.mxu0 %v1800
          %2071 = vmatprep.subr.mxu0 0.0
          %2072 = vmatpush1.msra.mxu0 %v1801
          %2073 = vmatprep.subr.mxu0 0.0
          %2074 = vmatpush1.msra.mxu0 %v1802
          %2075 = vmatprep.subr.mxu0 0.0
          %2076 = vmatpush1.msra.mxu0 %v1803
          %2077 = vmatprep.subr.mxu0 0.0
          %2078 = vmatpush1.msra.mxu0 %v1804
          %2079 = vmatprep.subr.mxu0 0.0
          %2080 = vmatpush1.msra.mxu0 %v1805
          %2081 = vmatprep.subr.mxu0 0.0
          %2082 = vmatpush1.msra.mxu0 %v1806
          %2083 = vmatprep.subr.mxu0 0.0
          %2084 = vmatpush1.msra.mxu0 %v1807
          %2085 = vmatprep.subr.mxu0 0.0
          %2086 = vmatpush1.msra.mxu0 %v1808
          %2087 = vmatprep.subr.mxu0 0.0
          %2088 = vmatpush1.msra.mxu0 %v1809
          %2089 = vmatprep.subr.mxu0 0.0
          %2090 = vmatpush1.msra.mxu0 %v1810
          %2091 = vmatprep.subr.mxu0 0.0
          %2092 = vmatpush1.msra.mxu0 %v1811
          %2093 = vmatprep.subr.mxu0 0.0
          %2094 = vmatpush1.msra.mxu0 %v1812
          %2095 = vmatprep.subr.mxu0 0.0
          %2096 = vmatpush1.msra.mxu0 %v1813
          %2097 = vmatprep.subr.mxu0 0.0
          %2098 = vmatpush1.msra.mxu0 %v1814
          %2099 = vmatprep.subr.mxu0 0.0
          %2100 = vmatpush1.msra.mxu0 %v1815
          %2101 = vmatprep.subr.mxu0 0.0
          %2102 = vmatpush1.msra.mxu0 %v1816
          %2103 = vmatprep.subr.mxu0 0.0
          %2104 = vmatpush1.msra.mxu0 %v1817
          %2105 = vmatprep.subr.mxu0 0.0
          %2106 = vmatpush1.msra.mxu0 %v1818
          %2107 = vmatprep.subr.mxu0 0.0
          %2108 = vmatpush1.msra.mxu0 %v1819
          %2109 = vmatprep.subr.mxu0 0.0
          %2110 = vmatpush1.msra.mxu0 %v1820
          %2111 = vmatprep.subr.mxu0 0.0
          %2112 = vmatpush1.msra.mxu0 %v1821
          %2113 = vmatprep.subr.mxu0 0.0
          %2114 = vmatpush1.msra.mxu0 %v1822
          %2115 = vmatprep.subr.mxu0 0.0
          %2116 = vmatpush1.msra.mxu0 %v1823
          %2117 = vmatprep.subr.mxu0 0.0
          %2118 = vmatpush1.msra.mxu0 %v1824
          %2119 = vmatprep.subr.mxu0 0.0
          %2120 = vmatpush1.msra.mxu0 %v1825
          %2121 = vmatprep.mubr.f32.mxu0 %v1763
          %2122 = vmatmul.mubr.f32.gmra.mrb[0].mxu0 %v1762
          %v2123 = vpop.f32.mrb[0].mxu0
          %v2124 = vadd.f32 %v2055, %v2123
          %v2125 = vpop.f32.mrb[0].mxu0
          %2126 = vdwg.mxu0
          %2127 = vmatprep.subr.mxu0 0.0
          %2128 = vmatpush1.msra.mxu0 %v1826
          %2129 = vmatprep.subr.mxu0 0.0
          %2130 = vmatpush1.msra.mxu0 %v1827
          %2131 = vmatprep.subr.mxu0 0.0
          %2132 = vmatpush1.msra.mxu0 %v1828
          %2133 = vmatprep.subr.mxu0 0.0
          %2134 = vmatpush1.msra.mxu0 %v1829
          %2135 = vmatprep.subr.mxu0 0.0
          %2136 = vmatpush1.msra.mxu0 %v1830
          %2137 = vmatprep.subr.mxu0 0.0
          %2138 = vmatpush1.msra.mxu0 %v1831
          %2139 = vmatprep.subr.mxu0 0.0
          %2140 = vmatpush1.msra.mxu0 %v1832
          %2141 = vmatprep.subr.mxu0 0.0
          %2142 = vmatpush1.msra.mxu0 %v1833
          %2143 = vmatprep.subr.mxu0 0.0
          %2144 = vmatpush1.msra.mxu0 %v1834
          %2145 = vmatprep.subr.mxu0 0.0
          %2146 = vmatpush1.msra.mxu0 %v1835
          %2147 = vmatprep.subr.mxu0 0.0
          %2148 = vmatpush1.msra.mxu0 %v1836
          %2149 = vmatprep.subr.mxu0 0.0
          %2150 = vmatpush1.msra.mxu0 %v1837
          %2151 = vmatprep.subr.mxu0 0.0
          %2152 = vmatpush1.msra.mxu0 %v1838
          %2153 = vmatprep.subr.mxu0 0.0
          %2154 = vmatpush1.msra.mxu0 %v1839
          %2155 = vmatprep.subr.mxu0 0.0
          %2156 = vmatpush1.msra.mxu0 %v1840
          %2157 = vmatprep.subr.mxu0 0.0
          %2158 = vmatpush1.msra.mxu0 %v1841
          %2159 = vmatprep.subr.mxu0 0.0
          %2160 = vmatpush1.msra.mxu0 %v1842
          %2161 = vmatprep.subr.mxu0 0.0
          %2162 = vmatpush1.msra.mxu0 %v1843
          %2163 = vmatprep.subr.mxu0 0.0
          %2164 = vmatpush1.msra.mxu0 %v1844
          %2165 = vmatprep.subr.mxu0 0.0
          %2166 = vmatpush1.msra.mxu0 %v1845
          %2167 = vmatprep.subr.mxu0 0.0
          %2168 = vmatpush1.msra.mxu0 %v1846
          %2169 = vmatprep.subr.mxu0 0.0
          %2170 = vmatpush1.msra.mxu0 %v1847
          %2171 = vmatprep.subr.mxu0 0.0
          %2172 = vmatpush1.msra.mxu0 %v1848
          %2173 = vmatprep.subr.mxu0 0.0
          %2174 = vmatpush1.msra.mxu0 %v1849
          %2175 = vmatprep.subr.mxu0 0.0
          %2176 = vmatpush1.msra.mxu0 %v1850
          %2177 = vmatprep.subr.mxu0 0.0
          %2178 = vmatpush1.msra.mxu0 %v1851
          %2179 = vmatprep.subr.mxu0 0.0
          %2180 = vmatpush1.msra.mxu0 %v1852
          %2181 = vmatprep.subr.mxu0 0.0
          %2182 = vmatpush1.msra.mxu0 %v1853
          %2183 = vmatprep.subr.mxu0 0.0
          %2184 = vmatpush1.msra.mxu0 %v1854
          %2185 = vmatprep.subr.mxu0 0.0
          %2186 = vmatpush1.msra.mxu0 %v1855
          %2187 = vmatprep.subr.mxu0 0.0
          %2188 = vmatpush1.msra.mxu0 %v1856
          %2189 = vmatprep.subr.mxu0 0.0
          %2190 = vmatpush1.msra.mxu0 %v1857
          %2191 = vmatprep.mubr.f32.mxu0 %v1765
          %2192 = vmatmul.mubr.f32.gmra.mrb[0].mxu0 %v1764
          %v2193 = vpop.f32.mrb[0].mxu0
          %v2194 = vadd.f32 %v2124, %v2193
          %v2195 = vpop.f32.mrb[0].mxu0
          %2196 = vdwg.mxu0
          %2197 = vmatprep.subr.mxu0 0.0
          %2198 = vmatpush1.msra.mxu0 %v1858
          %2199 = vmatprep.subr.mxu0 0.0
          %2200 = vmatpush1.msra.mxu0 %v1859
          %2201 = vmatprep.subr.mxu0 0.0
          %2202 = vmatpush1.msra.mxu0 %v1860
          %2203 = vmatprep.subr.mxu0 0.0
          %2204 = vmatpush1.msra.mxu0 %v1861
          %2205 = vmatprep.subr.mxu0 0.0
          %2206 = vmatpush1.msra.mxu0 %v1862
          %2207 = vmatprep.subr.mxu0 0.0
          %2208 = vmatpush1.msra.mxu0 %v1863
          %2209 = vmatprep.subr.mxu0 0.0
          %2210 = vmatpush1.msra.mxu0 %v1864
          %2211 = vmatprep.subr.mxu0 0.0
          %2212 = vmatpush1.msra.mxu0 %v1865
          %2213 = vmatprep.subr.mxu0 0.0
          %2214 = vmatpush1.msra.mxu0 %v1866
          %2215 = vmatprep.subr.mxu0 0.0
          %2216 = vmatpush1.msra.mxu0 %v1867
          %2217 = vmatprep.subr.mxu0 0.0
          %2218 = vmatpush1.msra.mxu0 %v1868
          %2219 = vmatprep.subr.mxu0 0.0
          %2220 = vmatpush1.msra.mxu0 %v1869
          %2221 = vmatprep.subr.mxu0 0.0
          %2222 = vmatpush1.msra.mxu0 %v1870
          %2223 = vmatprep.subr.mxu0 0.0
          %2224 = vmatpush1.msra.mxu0 %v1871
          %2225 = vmatprep.subr.mxu0 0.0
          %2226 = vmatpush1.msra.mxu0 %v1872
          %2227 = vmatprep.subr.mxu0 0.0
          %2228 = vmatpush1.msra.mxu0 %v1873
          %2229 = vmatprep.subr.mxu0 0.0
          %2230 = vmatpush1.msra.mxu0 %v1874
          %2231 = vmatprep.subr.mxu0 0.0
          %2232 = vmatpush1.msra.mxu0 %v1875
          %2233 = vmatprep.subr.mxu0 0.0
          %2234 = vmatpush1.msra.mxu0 %v1876
          %2235 = vmatprep.subr.mxu0 0.0
          %2236 = vmatpush1.msra.mxu0 %v1877
          %2237 = vmatprep.subr.mxu0 0.0
          %2238 = vmatpush1.msra.mxu0 %v1878
          %2239 = vmatprep.subr.mxu0 0.0
          %2240 = vmatpush1.msra.mxu0 %v1879
          %2241 = vmatprep.subr.mxu0 0.0
          %2242 = vmatpush1.msra.mxu0 %v1880
          %2243 = vmatprep.subr.mxu0 0.0
          %2244 = vmatpush1.msra.mxu0 %v1881
          %2245 = vmatprep.subr.mxu0 0.0
          %2246 = vmatpush1.msra.mxu0 %v1882
          %2247 = vmatprep.subr.mxu0 0.0
          %2248 = vmatpush1.msra.mxu0 %v1883
          %2249 = vmatprep.subr.mxu0 0.0
          %2250 = vmatpush1.msra.mxu0 %v1884
          %2251 = vmatprep.subr.mxu0 0.0
          %2252 = vmatpush1.msra.mxu0 %v1885
          %2253 = vmatprep.subr.mxu0 0.0
          %2254 = vmatpush1.msra.mxu0 %v1886
          %2255 = vmatprep.subr.mxu0 0.0
          %2256 = vmatpush1.msra.mxu0 %v1887
          %2257 = vmatprep.subr.mxu0 0.0
          %2258 = vmatpush1.msra.mxu0 %v1888
          %2259 = vmatprep.subr.mxu0 0.0
          %2260 = vmatpush1.msra.mxu0 %v1889
          %2261 = vmatprep.mubr.f32.mxu0 %v1767
          %2262 = vmatmul.mubr.f32.gmra.mrb[0].mxu0 %v1766
          %v2263 = vpop.f32.mrb[0].mxu0
          %v2264 = vadd.f32 %v2194, %v2263
          %v2265 = vpop.f32.mrb[0].mxu0
          %2266 = vdwg.mxu0
          %2267 = vmatprep.subr.mxu0 0.0
          %2268 = vmatpush1.msra.mxu0 %v1890
          %2269 = vmatprep.subr.mxu0 0.0
          %2270 = vmatpush1.msra.mxu0 %v1891
          %2271 = vmatprep.subr.mxu0 0.0
          %2272 = vmatpush1.msra.mxu0 %v1892
          %2273 = vmatprep.subr.mxu0 0.0
          %2274 = vmatpush1.msra.mxu0 %v1893
          %2275 = vmatprep.subr.mxu0 0.0
          %2276 = vmatpush1.msra.mxu0 %v1894
          %2277 = vmatprep.subr.mxu0 0.0
          %2278 = vmatpush1.msra.mxu0 %v1895
          %2279 = vmatprep.subr.mxu0 0.0
          %2280 = vmatpush1.msra.mxu0 %v1896
          %2281 = vmatprep.subr.mxu0 0.0
          %2282 = vmatpush1.msra.mxu0 %v1897
          %2283 = vmatprep.subr.mxu0 0.0
          %2284 = vmatpush1.msra.mxu0 %v1898
          %2285 = vmatprep.subr.mxu0 0.0
          %2286 = vmatpush1.msra.mxu0 %v1899
          %2287 = vmatprep.subr.mxu0 0.0
          %2288 = vmatpush1.msra.mxu0 %v1900
          %2289 = vmatprep.subr.mxu0 0.0
          %2290 = vmatpush1.msra.mxu0 %v1901
          %2291 = vmatprep.subr.mxu0 0.0
          %2292 = vmatpush1.msra.mxu0 %v1902
          %2293 = vmatprep.subr.mxu0 0.0
          %2294 = vmatpush1.msra.mxu0 %v1903
          %2295 = vmatprep.subr.mxu0 0.0
          %2296 = vmatpush1.msra.mxu0 %v1904
          %2297 = vmatprep.subr.mxu0 0.0
          %2298 = vmatpush1.msra.mxu0 %v1905
          %2299 = vmatprep.subr.mxu0 0.0
          %2300 = vmatpush1.msra.mxu0 %v1906
          %2301 = vmatprep.subr.mxu0 0.0
          %2302 = vmatpush1.msra.mxu0 %v1907
          %2303 = vmatprep.subr.mxu0 0.0
          %2304 = vmatpush1.msra.mxu0 %v1908
          %2305 = vmatprep.subr.mxu0 0.0
          %2306 = vmatpush1.msra.mxu0 %v1909
          %2307 = vmatprep.subr.mxu0 0.0
          %2308 = vmatpush1.msra.mxu0 %v1910
          %2309 = vmatprep.subr.mxu0 0.0
          %2310 = vmatpush1.msra.mxu0 %v1911
          %2311 = vmatprep.subr.mxu0 0.0
          %2312 = vmatpush1.msra.mxu0 %v1912
          %2313 = vmatprep.subr.mxu0 0.0
          %2314 = vmatpush1.msra.mxu0 %v1913
          %2315 = vmatprep.subr.mxu0 0.0
          %2316 = vmatpush1.msra.mxu0 %v1914
          %2317 = vmatprep.subr.mxu0 0.0
          %2318 = vmatpush1.msra.mxu0 %v1915
          %2319 = vmatprep.subr.mxu0 0.0
          %2320 = vmatpush1.msra.mxu0 %v1916
          %2321 = vmatprep.subr.mxu0 0.0
          %2322 = vmatpush1.msra.mxu0 %v1917
          %2323 = vmatprep.subr.mxu0 0.0
          %2324 = vmatpush1.msra.mxu0 %v1918
          %2325 = vmatprep.subr.mxu0 0.0
          %2326 = vmatpush1.msra.mxu0 %v1919
          %2327 = vmatprep.subr.mxu0 0.0
          %2328 = vmatpush1.msra.mxu0 %v1920
          %2329 = vmatprep.subr.mxu0 0.0
          %2330 = vmatpush1.msra.mxu0 %v1921
          %2331 = vmatprep.mubr.f32.mxu0 %v1769
          %2332 = vmatmul.mubr.f32.gmra.mrb[0].mxu0 %v1768
          %v2333 = vpop.f32.mrb[0].mxu0
          %v2334 = vadd.f32 %v2264, %v2333
          %v2335 = vpop.f32.mrb[0].mxu0
          %2336 = vdwg.mxu0
          %2337 = vmatprep.subr.mxu0 0.0
          %2338 = vmatpush1.msra.mxu0 %v1922
          %2339 = vmatprep.subr.mxu0 0.0
          %2340 = vmatpush1.msra.mxu0 %v1923
          %2341 = vmatprep.subr.mxu0 0.0
          %2342 = vmatpush1.msra.mxu0 %v1924
          %2343 = vmatprep.subr.mxu0 0.0
          %2344 = vmatpush1.msra.mxu0 %v1925
          %2345 = vmatprep.subr.mxu0 0.0
          %2346 = vmatpush1.msra.mxu0 %v1926
          %2347 = vmatprep.subr.mxu0 0.0
          %2348 = vmatpush1.msra.mxu0 %v1927
          %2349 = vmatprep.subr.mxu0 0.0
          %2350 = vmatpush1.msra.mxu0 %v1928
          %2351 = vmatprep.subr.mxu0 0.0
          %2352 = vmatpush1.msra.mxu0 %v1929
          %2353 = vmatprep.subr.mxu0 0.0
          %2354 = vmatpush1.msra.mxu0 %v1930
          %2355 = vmatprep.subr.mxu0 0.0
          %2356 = vmatpush1.msra.mxu0 %v1931
          %2357 = vmatprep.subr.mxu0 0.0
          %2358 = vmatpush1.msra.mxu0 %v1932
          %2359 = vmatprep.subr.mxu0 0.0
          %2360 = vmatpush1.msra.mxu0 %v1933
          %2361 = vmatprep.subr.mxu0 0.0
          %2362 = vmatpush1.msra.mxu0 %v1934
          %2363 = vmatprep.subr.mxu0 0.0
          %2364 = vmatpush1.msra.mxu0 %v1935
          %2365 = vmatprep.subr.mxu0 0.0
          %2366 = vmatpush1.msra.mxu0 %v1936
          %2367 = vmatprep.subr.mxu0 0.0
          %2368 = vmatpush1.msra.mxu0 %v1937
          %2369 = vmatprep.subr.mxu0 0.0
          %2370 = vmatpush1.msra.mxu0 %v1938
          %2371 = vmatprep.subr.mxu0 0.0
          %2372 = vmatpush1.msra.mxu0 %v1939
          %2373 = vmatprep.subr.mxu0 0.0
          %2374 = vmatpush1.msra.mxu0 %v1940
          %2375 = vmatprep.subr.mxu0 0.0
          %2376 = vmatpush1.msra.mxu0 %v1941
          %2377 = vmatprep.subr.mxu0 0.0
          %2378 = vmatpush1.msra.mxu0 %v1942
          %2379 = vmatprep.subr.mxu0 0.0
          %2380 = vmatpush1.msra.mxu0 %v1943
          %2381 = vmatprep.subr.mxu0 0.0
          %2382 = vmatpush1.msra.mxu0 %v1944
          %2383 = vmatprep.subr.mxu0 0.0
          %2384 = vmatpush1.msra.mxu0 %v1945
          %2385 = vmatprep.subr.mxu0 0.0
          %2386 = vmatpush1.msra.mxu0 %v1946
          %2387 = vmatprep.subr.mxu0 0.0
          %2388 = vmatpush1.msra.mxu0 %v1947
          %2389 = vmatprep.subr.mxu0 0.0
          %2390 = vmatpush1.msra.mxu0 %v1948
          %2391 = vmatprep.subr.mxu0 0.0
          %2392 = vmatpush1.msra.mxu0 %v1949
          %2393 = vmatprep.subr.mxu0 0.0
          %2394 = vmatpush1.msra.mxu0 %v1950
          %2395 = vmatprep.subr.mxu0 0.0
          %2396 = vmatpush1.msra.mxu0 %v1951
          %2397 = vmatprep.subr.mxu0 0.0
          %2398 = vmatpush1.msra.mxu0 %v1952
          %2399 = vmatprep.subr.mxu0 0.0
          %2400 = vmatpush1.msra.mxu0 %v1953
          %2401 = vmatprep.mubr.f32.mxu0 %v1771
          %2402 = vmatmul.mubr.f32.gmra.mrb[0].mxu0 %v1770
          %v2403 = vpop.f32.mrb[0].mxu0
          %v2404 = vadd.f32 %v2334, %v2403
          %v2405 = vpop.f32.mrb[0].mxu0
          %2406 = vdwg.mxu0
          %2407 = vmatprep.subr.mxu0 0.0
          %2408 = vmatpush1.msra.mxu0 %v1954
          %2409 = vmatprep.subr.mxu0 0.0
          %2410 = vmatpush1.msra.mxu0 %v1955
          %2411 = vmatprep.subr.mxu0 0.0
          %2412 = vmatpush1.msra.mxu0 %v1956
          %2413 = vmatprep.subr.mxu0 0.0
          %2414 = vmatpush1.msra.mxu0 %v1957
          %2415 = vmatprep.subr.mxu0 0.0
          %2416 = vmatpush1.msra.mxu0 %v1958
          %2417 = vmatprep.subr.mxu0 0.0
          %2418 = vmatpush1.msra.mxu0 %v1959
          %2419 = vmatprep.subr.mxu0 0.0
          %2420 = vmatpush1.msra.mxu0 %v1960
          %2421 = vmatprep.subr.mxu0 0.0
          %2422 = vmatpush1.msra.mxu0 %v1961
          %2423 = vmatprep.subr.mxu0 0.0
          %2424 = vmatpush1.msra.mxu0 %v1962
          %2425 = vmatprep.subr.mxu0 0.0
          %2426 = vmatpush1.msra.mxu0 %v1963
          %2427 = vmatprep.subr.mxu0 0.0
          %2428 = vmatpush1.msra.mxu0 %v1964
          %2429 = vmatprep.subr.mxu0 0.0
          %2430 = vmatpush1.msra.mxu0 %v1965
          %2431 = vmatprep.subr.mxu0 0.0
          %2432 = vmatpush1.msra.mxu0 %v1966
          %2433 = vmatprep.subr.mxu0 0.0
          %2434 = vmatpush1.msra.mxu0 %v1967
          %2435 = vmatprep.subr.mxu0 0.0
          %2436 = vmatpush1.msra.mxu0 %v1968
          %2437 = vmatprep.subr.mxu0 0.0
          %2438 = vmatpush1.msra.mxu0 %v1969
          %2439 = vmatprep.subr.mxu0 0.0
          %2440 = vmatpush1.msra.mxu0 %v1970
          %2441 = vmatprep.subr.mxu0 0.0
          %2442 = vmatpush1.msra.mxu0 %v1971
          %2443 = vmatprep.subr.mxu0 0.0
          %2444 = vmatpush1.msra.mxu0 %v1972
          %2445 = vmatprep.subr.mxu0 0.0
          %2446 = vmatpush1.msra.mxu0 %v1973
          %2447 = vmatprep.subr.mxu0 0.0
          %2448 = vmatpush1.msra.mxu0 %v1974
          %2449 = vmatprep.subr.mxu0 0.0
          %2450 = vmatpush1.msra.mxu0 %v1975
          %2451 = vmatprep.subr.mxu0 0.0
          %2452 = vmatpush1.msra.mxu0 %v1976
          %2453 = vmatprep.subr.mxu0 0.0
          %2454 = vmatpush1.msra.mxu0 %v1977
          %2455 = vmatprep.subr.mxu0 0.0
          %2456 = vmatpush1.msra.mxu0 %v1978
          %2457 = vmatprep.subr.mxu0 0.0
          %2458 = vmatpush1.msra.mxu0 %v1979
          %2459 = vmatprep.subr.mxu0 0.0
          %2460 = vmatpush1.msra.mxu0 %v1980
          %2461 = vmatprep.subr.mxu0 0.0
          %2462 = vmatpush1.msra.mxu0 %v1981
          %2463 = vmatprep.subr.mxu0 0.0
          %2464 = vmatpush1.msra.mxu0 %v1982
          %2465 = vmatprep.subr.mxu0 0.0
          %2466 = vmatpush1.msra.mxu0 %v1983
          %2467 = vmatprep.subr.mxu0 0.0
          %2468 = vmatpush1.msra.mxu0 %v1984
          %2469 = vmatprep.subr.mxu0 0.0
          %2470 = vmatpush1.msra.mxu0 %v1985
          %2471 = vmatprep.mubr.f32.mxu0 %v1773
          %2472 = vmatmul.mubr.f32.gmra.mrb[0].mxu0 %v1772
          %v2473 = vpop.f32.mrb[0].mxu0
          %v2474 = vadd.f32 %v2404, %v2473
          %v2475 = vpop.f32.mrb[0].mxu0
          %2476 = vdwg.mxu0
          %2477 = vmatprep.subr.mxu0 0.0
          %2478 = vmatpush1.msra.mxu0 %v1986
          %2479 = vmatprep.subr.mxu0 0.0
          %2480 = vmatpush1.msra.mxu0 %v1987
          %2481 = vmatprep.subr.mxu0 0.0
          %2482 = vmatpush1.msra.mxu0 %v1988
          %2483 = vmatprep.subr.mxu0 0.0
          %2484 = vmatpush1.msra.mxu0 %v1989
          %2485 = vmatprep.subr.mxu0 0.0
          %2486 = vmatpush1.msra.mxu0 %v1990
          %2487 = vmatprep.subr.mxu0 0.0
          %2488 = vmatpush1.msra.mxu0 %v1991
          %2489 = vmatprep.subr.mxu0 0.0
          %2490 = vmatpush1.msra.mxu0 %v1992
          %2491 = vmatprep.subr.mxu0 0.0
          %2492 = vmatpush1.msra.mxu0 %v1993
          %2493 = vmatprep.subr.mxu0 0.0
          %2494 = vmatpush1.msra.mxu0 %v1994
          %2495 = vmatprep.subr.mxu0 0.0
          %2496 = vmatpush1.msra.mxu0 %v1995
          %2497 = vmatprep.subr.mxu0 0.0
          %2498 = vmatpush1.msra.mxu0 %v1996
          %2499 = vmatprep.subr.mxu0 0.0
          %2500 = vmatpush1.msra.mxu0 %v1997
          %2501 = vmatprep.subr.mxu0 0.0
          %2502 = vmatpush1.msra.mxu0 %v1998
          %2503 = vmatprep.subr.mxu0 0.0
          %2504 = vmatpush1.msra.mxu0 %v1999
          %2505 = vmatprep.subr.mxu0 0.0
          %2506 = vmatpush1.msra.mxu0 %v2000
          %2507 = vmatprep.subr.mxu0 0.0
          %2508 = vmatpush1.msra.mxu0 %v2001
          %2509 = vmatprep.subr.mxu0 0.0
          %2510 = vmatpush1.msra.mxu0 %v2002
          %2511 = vmatprep.subr.mxu0 0.0
          %2512 = vmatpush1.msra.mxu0 %v2003
          %2513 = vmatprep.subr.mxu0 0.0
          %2514 = vmatpush1.msra.mxu0 %v2004
          %2515 = vmatprep.subr.mxu0 0.0
          %2516 = vmatpush1.msra.mxu0 %v2005
          %2517 = vmatprep.subr.mxu0 0.0
          %2518 = vmatpush1.msra.mxu0 %v2006
          %2519 = vmatprep.subr.mxu0 0.0
          %2520 = vmatpush1.msra.mxu0 %v2007
          %2521 = vmatprep.subr.mxu0 0.0
          %2522 = vmatpush1.msra.mxu0 %v2008
          %2523 = vmatprep.subr.mxu0 0.0
          %2524 = vmatpush1.msra.mxu0 %v2009
          %2525 = vmatprep.subr.mxu0 0.0
          %2526 = vmatpush1.msra.mxu0 %v2010
          %2527 = vmatprep.subr.mxu0 0.0
          %2528 = vmatpush1.msra.mxu0 %v2011
          %2529 = vmatprep.subr.mxu0 0.0
          %2530 = vmatpush1.msra.mxu0 %v2012
          %2531 = vmatprep.subr.mxu0 0.0
          %2532 = vmatpush1.msra.mxu0 %v2013
          %2533 = vmatprep.subr.mxu0 0.0
          %2534 = vmatpush1.msra.mxu0 %v2014
          %2535 = vmatprep.subr.mxu0 0.0
          %2536 = vmatpush1.msra.mxu0 %v2015
          %2537 = vmatprep.subr.mxu0 0.0
          %2538 = vmatpush1.msra.mxu0 %v2016
          %2539 = vmatprep.subr.mxu0 0.0
          %2540 = vmatpush1.msra.mxu0 %v2017
          %2541 = vmatprep.mubr.f32.mxu0 %v1775
          %2542 = vmatmul.mubr.f32.gmra.mrb[0].mxu0 %v1774
          %v2543 = vpop.f32.mrb[0].mxu0
          %v2544 = vadd.f32 %v2474, %v2543
          %v2545 = vpop.f32.mrb[0].mxu0
          %2546 = vdwg.mxu0
          %2547 = vmatprep.subr.mxu0 0.0
          %2548 = vmatpush1.msra.mxu0 %v2018
          %2549 = vmatprep.subr.mxu0 0.0
          %2550 = vmatpush1.msra.mxu0 %v2019
          %2551 = vmatprep.subr.mxu0 0.0
          %2552 = vmatpush1.msra.mxu0 %v2020
          %2553 = vmatprep.subr.mxu0 0.0
          %2554 = vmatpush1.msra.mxu0 %v2021
          %2555 = vmatprep.subr.mxu0 0.0
          %2556 = vmatpush1.msra.mxu0 %v2022
          %2557 = vmatprep.subr.mxu0 0.0
          %2558 = vmatpush1.msra.mxu0 %v2023
          %2559 = vmatprep.subr.mxu0 0.0
          %2560 = vmatpush1.msra.mxu0 %v2024
          %2561 = vmatprep.subr.mxu0 0.0
          %2562 = vmatpush1.msra.mxu0 %v2025
          %2563 = vmatprep.subr.mxu0 0.0
          %2564 = vmatpush1.msra.mxu0 %v2026
          %2565 = vmatprep.subr.mxu0 0.0
          %2566 = vmatpush1.msra.mxu0 %v2027
          %2567 = vmatprep.subr.mxu0 0.0
          %2568 = vmatpush1.msra.mxu0 %v2028
          %2569 = vmatprep.subr.mxu0 0.0
          %2570 = vmatpush1.msra.mxu0 %v2029
          %2571 = vmatprep.subr.mxu0 0.0
          %2572 = vmatpush1.msra.mxu0 %v2030
          %2573 = vmatprep.subr.mxu0 0.0
          %2574 = vmatpush1.msra.mxu0 %v2031
          %2575 = vmatprep.subr.mxu0 0.0
          %2576 = vmatpush1.msra.mxu0 %v2032
          %2577 = vmatprep.subr.mxu0 0.0
          %2578 = vmatpush1.msra.mxu0 %v2033
          %2579 = vmatprep.subr.mxu0 0.0
          %2580 = vmatpush1.msra.mxu0 %v2034
          %2581 = vmatprep.subr.mxu0 0.0
          %2582 = vmatpush1.msra.mxu0 %v2035
          %2583 = vmatprep.subr.mxu0 0.0
          %2584 = vmatpush1.msra.mxu0 %v2036
          %2585 = vmatprep.subr.mxu0 0.0
          %2586 = vmatpush1.msra.mxu0 %v2037
          %2587 = vmatprep.subr.mxu0 0.0
          %2588 = vmatpush1.msra.mxu0 %v2038
          %2589 = vmatprep.subr.mxu0 0.0
          %2590 = vmatpush1.msra.mxu0 %v2039
          %2591 = vmatprep.subr.mxu0 0.0
          %2592 = vmatpush1.msra.mxu0 %v2040
          %2593 = vmatprep.subr.mxu0 0.0
          %2594 = vmatpush1.msra.mxu0 %v2041
          %2595 = vmatprep.subr.mxu0 0.0
          %2596 = vmatpush1.msra.mxu0 %v2042
          %2597 = vmatprep.subr.mxu0 0.0
          %2598 = vmatpush1.msra.mxu0 %v2043
          %2599 = vmatprep.subr.mxu0 0.0
          %2600 = vmatpush1.msra.mxu0 %v2044
          %2601 = vmatprep.subr.mxu0 0.0
          %2602 = vmatpush1.msra.mxu0 %v2045
          %2603 = vmatprep.subr.mxu0 0.0
          %2604 = vmatpush1.msra.mxu0 %v2046
          %2605 = vmatprep.subr.mxu0 0.0
          %2606 = vmatpush1.msra.mxu0 %v2047
          %2607 = vmatprep.subr.mxu0 0.0
          %2608 = vmatpush1.msra.mxu0 %v2048
          %2609 = vmatprep.subr.mxu0 0.0
          %2610 = vmatpush1.msra.mxu0 %v2049
          %2611 = vmatprep.mubr.f32.mxu0 %v1777
          %2612 = vmatmul.mubr.f32.gmra.mrb[0].mxu0 %v1776
          %v2613 = vpop.f32.mrb[0].mxu0
          %v2614 = vadd.f32 %v2544, %v2613
          %v2615 = vpop.f32.mrb[0].mxu0
          %2616 = vdwg.mxu0
          %vm2617 = vcmask 80896
          %2618 = vst.msk [vmem:[%s250] sm:$0xff] %vm2617, %v2614
        $region48: #{tpu_custom_call.1} parent=31 // pred_fallthru
          _
        %s2619 = sand.u32 %s116, 1
        %s2620 = scalar_lea.sflag [#allocation5], %s2619
        %s2621 = sand.u32 %s116, 1
        %s2622 = smul.addr %s2621, 8
        %s2623 = scalar_lea.vmem [#allocation8], %s2622
        %s2624 = sand.u32 %s142, 1
        %s2625 = scalar_lea.sflag [#allocation10], %s2624
        %s2626 = sand.u32 %s142, 1
        %s2627 = smul.addr %s2626, 128
        %s2628 = scalar_lea.vmem [#allocation9], %s2627
        // Predicated region
        $region49: #{tpu_custom_call.1} parent=31 // pred_check
          %p2629 = pneg %p126
        $region50: #{tpu_custom_call.1} parent=31 // pred_check_branch
          %2631 = sbr.rel (%p2629) target = $region52
        $region51: #{tpu_custom_call.1} parent=31 // pred_region
          %s2633 = ssub.s32 128, 128
          %2634 = vsyncadd %s2620, %s2633
          %s2635 = smul.addr %s30, 128
          %s2636 = scalar_lea.hbm %s3, %s2635
          %s2638 = sshll.u32 %s2623, 4
          %s2639 = int_to_ptr.vmem [resolvable:$true] %s2638
          %2641 = dma.vmem_to_hbm [thread:$0]  %s2639, 128, %s2636, %s2620
        $region52: #{tpu_custom_call.1} parent=31 // pred_fallthru
          _
        // Predicated region
        $region53: #{tpu_custom_call.1} parent=31 // pred_check
          %p2642 = pneg %p152
        $region54: #{tpu_custom_call.1} parent=31 // pred_check_branch
          %2644 = sbr.rel (%p2642) target = $region56
        $region55: #{tpu_custom_call.1} parent=31 // pred_region
          %s2646 = ssub.s32 2048, 2048
          %2647 = vsyncadd %s2625, %s2646
          %s2648 = smul.addr %s30, 16
          %s2649 = smul.addr %s2648, 128
          %s2650 = scalar_lea.hbm %s4, %s2649
          %s2652 = sshll.u32 %s2628, 4
          %s2653 = int_to_ptr.vmem [resolvable:$true] %s2652
          %2655 = dma.vmem_to_hbm [thread:$0]  %s2653, 2048, %s2650, %s2625
        $region56: #{tpu_custom_call.1} parent=31 // pred_fallthru
          _
      $region32: #{tpu_custom_call.1} parent=5 // pred_fallthru
        _
      %p2656 = scmp.le.s32.totalorder 2, %s21
      // Predicated region
      $region57: #{tpu_custom_call.1} parent=5 // pred_check
        %p2657 = pneg %p2656
      $region58: #{tpu_custom_call.1} parent=5 // pred_check_branch
        %2659 = sbr.rel (%p2657) target = $region60
      $region59: #{tpu_custom_call.1} parent=5 // pred_region
        %s2660 = ssub.s32 %s21, 2
        // Predicated region
        $region61: #{tpu_custom_call.1} parent=59 // pred_check
          %p2661 = pneg %p132
        $region62: #{tpu_custom_call.1} parent=59 // pred_check_branch
          %2663 = sbr.rel (%p2661) target = $region64
        $region63: #{tpu_custom_call.1} parent=59 // pred_region
          %s2664 = sand.u32 %s117, 1
          %s2665 = scalar_lea.sflag [#allocation5], %s2664
          %s2666 = sand.u32 %s117, 1
          %s2667 = smul.addr %s2666, 8
          %s2668 = scalar_lea.vmem [#allocation8], %s2667
          %2669 = dma.done %s2665, 128
        $region64: #{tpu_custom_call.1} parent=59 // pred_fallthru
          _
        // Predicated region
        $region65: #{tpu_custom_call.1} parent=59 // pred_check
          %p2670 = pneg %p158
        $region66: #{tpu_custom_call.1} parent=59 // pred_check_branch
          %2672 = sbr.rel (%p2670) target = $region68
        $region67: #{tpu_custom_call.1} parent=59 // pred_region
          %s2673 = sand.u32 %s143, 1
          %s2674 = scalar_lea.sflag [#allocation10], %s2673
          %s2675 = sand.u32 %s143, 1
          %s2676 = smul.addr %s2675, 128
          %s2677 = scalar_lea.vmem [#allocation9], %s2676
          %2678 = dma.done %s2674, 2048
        $region68: #{tpu_custom_call.1} parent=59 // pred_fallthru
          _
      $region60: #{tpu_custom_call.1} parent=5 // pred_fallthru
        _
    $region6: #{tpu_custom_call.1} parent=1 // loop_footer
      %s25 = sadd.s32 1, %s21
    $region7: #{tpu_custom_call.1} parent=1 // loop_footer_branch
      %20 = sbr.rel target = $region3
    $region8: #{tpu_custom_call.1} parent=1 // loop_exit
      _
    %2679 = vsyncpa [#allocation4], 1
    %s2680 = scalar_lea.sflag [#allocation4], 1
    %2681 = vsyncpa %s2680, 1
    %2682 = vsyncpa [#allocation7], 1
    %2683 = vsyncpa [#allocation5], 1
    %s2684 = scalar_lea.sflag [#allocation5], 1
    %2685 = vsyncpa %s2684, 1
    %2686 = vsyncpa [#allocation10], 1
    %s2687 = scalar_lea.sflag [#allocation10], 1
    %2688 = vsyncpa %s2687, 1

</llo_original>
